<compile_context>
chip_gen: v5e
topology: v5e:2x2
jax: 0.10.0
libtpu: 0.0.40
codegen_flags: <defaults>
</compile_context>

<pallas_src>
import jax
import jax.numpy as jnp
import numpy as np
from jax.experimental import pallas as pl
from jax.experimental.pallas import tpu as pltpu


_HIGHEST = jax.lax.Precision.HIGHEST
_CP = pltpu.CompilerParams(dimension_semantics=("parallel",))


# ------------------------- in-kernel 3x3 'SAME' conv ------------------------

def _conv3x3_same(inner, w3_ref, pad_ref):
    """3x3 stride-1 pad-1 conv of `inner` (H, W, Ci) f32; weights (3,3,Ci,Co).

    The halo lives in `pad_ref`, a zero-initialised (H+2, W+8, Ci) VMEM
    scratch (width padded to a sublane multiple so row views reshape for
    free).  9 whole-plane matmuls accumulate in f32; the dx shift is applied
    once per dx on the accumulated plane (3 offset slices instead of 9).
    """
    H, W, Ci = inner.shape
    Co = w3_ref.shape[-1]
    Wpad = pad_ref.shape[1]                       # W + 8

    pad_ref[...] = jnp.zeros_like(pad_ref)
    pad_ref[1:H + 1, 1:W + 1, :] = inner

    # Three row-shifted full-width views of the padded plane (major-dim
    # slices, loaded once each).
    rows = [pad_ref[dy:dy + H, :, :].reshape(H * Wpad, Ci) for dy in range(3)]

    out = jnp.zeros((H, W, Co), jnp.float32)
    for dx in range(3):
        s = jnp.zeros((H * Wpad, Co), jnp.float32)
        for dy in range(3):
            s = s + jnp.dot(rows[dy], w3_ref[dy, dx],
                            preferred_element_type=jnp.float32)
        out = out + s.reshape(H, Wpad, Co)[:, dx:dx + W, :]
    return out


# ------------------------------ fused kernels -------------------------------

def _fpn_top_kernel(x_ref, w1_ref, w3_ref, inner_ref, out_ref, pad_ref):
    # x_ref: (1, H*W, Cin)  w1_ref: (Cin, Co)  w3_ref: (3, 3, Co, Co)
    # inner_ref / out_ref: (1, H, W, Co)
    _, H, W, Co = inner_ref.shape
    lat = jnp.dot(x_ref[0], w1_ref[...],
                  preferred_element_type=jnp.float32)          # (H*W, Co)
    inner = lat.reshape(H, W, Co)
    inner_ref[0] = inner.astype(inner_ref.dtype)
    out_ref[0] = _conv3x3_same(inner, w3_ref, pad_ref).astype(out_ref.dtype)


def _fpn_level_kernel(x_ref, w1_ref, uph_ref, mw_ref, w3_ref,
                      inner_ref, out_ref, pad_ref):
    # x_ref:   (1, H*W, Cin)      lateral input (flattened spatial)
    # w1_ref:  (Cin, Co)          1x1 lateral weights
    # uph_ref: (1, H, Wp, Co)     top-down map, already height-interpolated
    # mw_ref:  (W, Wp)            width interpolation matrix
    # w3_ref:  (3, 3, Co, Co)     3x3 output-conv weights
    # inner_ref / out_ref: (1, H, W, Co)
    _, H, W, Co = inner_ref.shape
    Wp = uph_ref.shape[2]

    # lateral 1x1 conv: one big channel matmul over all H*W rows
    lat = jnp.dot(x_ref[0], w1_ref[...],
                  preferred_element_type=jnp.float32)          # (H*W, Co)

    # width half of the separable bilinear upsample, fused as an H-batched MXU
    # matmul: per row h, (W, Wp) @ (Wp, Co).
    up_h = uph_ref[0].astype(jnp.float32)                       # (H, Wp, Co)
    mw_b = jnp.broadcast_to(mw_ref[...][None], (H, W, Wp))
    td = jnp.einsum('hwq,hqc->hwc', mw_b, up_h,
                    preferred_element_type=jnp.float32)         # (H, W, Co)

    inner = lat.reshape(H, W, Co) + td
    inner_ref[0] = inner.astype(inner_ref.dtype)
    out_ref[0] = _conv3x3_same(inner, w3_ref, pad_ref).astype(out_ref.dtype)


# ------------------------------ pallas wrappers -----------------------------

def _fpn_top(x, w1, w3):
    N, H, W, Cin = x.shape
    Co = w1.shape[1]
    x2 = x.reshape(N, H * W, Cin)          # free reshape (row-major contiguous)
    return pl.pallas_call(
        _fpn_top_kernel,
        out_shape=(jax.ShapeDtypeStruct((N, H, W, Co), x.dtype),
                   jax.ShapeDtypeStruct((N, H, W, Co), x.dtype)),
        grid=(N,),
        in_specs=[
            pl.BlockSpec((1, H * W, Cin), lambda n: (n, 0, 0)),
            pl.BlockSpec((Cin, Co), lambda n: (0, 0)),
            pl.BlockSpec((3, 3, Co, Co), lambda n: (0, 0, 0, 0)),
        ],
        out_specs=(
            pl.BlockSpec((1, H, W, Co), lambda n: (n, 0, 0, 0)),
            pl.BlockSpec((1, H, W, Co), lambda n: (n, 0, 0, 0)),
        ),
        scratch_shapes=[pltpu.VMEM((H + 2, W + 8, Co), jnp.float32)],
        compiler_params=_CP,
    )(x2, w1, w3)


def _fpn_level(x, w1, up_h, mw, w3):
    N, H, W, Cin = x.shape
    Co = w1.shape[1]
    Wp = up_h.shape[2]
    x2 = x.reshape(N, H * W, Cin)
    return pl.pallas_call(
        _fpn_level_kernel,
        out_shape=(jax.ShapeDtypeStruct((N, H, W, Co), x.dtype),
                   jax.ShapeDtypeStruct((N, H, W, Co), x.dtype)),
        grid=(N,),
        in_specs=[
            pl.BlockSpec((1, H * W, Cin), lambda n: (n, 0, 0)),
            pl.BlockSpec((Cin, Co), lambda n: (0, 0)),
            pl.BlockSpec((1, H, Wp, Co), lambda n: (n, 0, 0, 0)),
            pl.BlockSpec((W, Wp), lambda n: (0, 0)),
            pl.BlockSpec((3, 3, Co, Co), lambda n: (0, 0, 0, 0)),
        ],
        out_specs=(
            pl.BlockSpec((1, H, W, Co), lambda n: (n, 0, 0, 0)),
            pl.BlockSpec((1, H, W, Co), lambda n: (n, 0, 0, 0)),
        ),
        scratch_shapes=[pltpu.VMEM((H + 2, W + 8, Co), jnp.float32)],
        compiler_params=_CP,
    )(x2, w1, up_h, mw, w3)


# ------------------- bilinear upsample (PyTorch semantics) ------------------

def _interp_matrix(out_size, in_size):
    """F.interpolate(mode='bilinear', align_corners=False) source-index math,
    as a dense (out, in) interpolation matrix (static, built with numpy)."""
    if out_size == in_size:
        return jnp.eye(out_size, dtype=jnp.float32)
    scale = in_size / out_size
    m = np.zeros((out_size, in_size), np.float32)
    for d in range(out_size):
        src = max(scale * (d + 0.5) - 0.5, 0.0)
        i0 = min(int(np.floor(src)), in_size - 1)
        i1 = min(i0 + 1, in_size - 1)
        lam = src - i0
        m[d, i0] += 1.0 - lam
        m[d, i1] += lam
    return jnp.asarray(m)


# -------------------------------- FPN forward -------------------------------

def fpn_forward(xs, inner_ws, layer_ws):
    last_inner, top_out = _fpn_top(xs[-1], inner_ws[-1], layer_ws[-1])
    results = [top_out]
    for idx in range(len(xs) - 2, -1, -1):
        _, H, W, _ = xs[idx].shape
        Hp, Wp = last_inner.shape[1], last_inner.shape[2]
        mh = _interp_matrix(H, Hp)
        mw = _interp_matrix(W, Wp)
        # Height half of the separable bilinear upsample on the LOW-RES map
        # (tiny XLA einsum); the width half is fused into the level kernel.
        up_h = jnp.einsum('hp,npqc->nhqc', mh, last_inner, precision=_HIGHEST)
        last_inner, out = _fpn_level(xs[idx], inner_ws[idx], up_h, mw,
                                     layer_ws[idx])
        results.insert(0, out)
    return tuple(results)


# ------------------------- pure-JAX reference (check) -----------------------

def _ref_conv1x1(x, w):
    return jax.lax.conv_general_dilated(
        x, w[None, None], (1, 1), 'VALID',
        dimension_numbers=('NHWC', 'HWIO', 'NHWC'), precision=_HIGHEST)


def _ref_conv3x3(x, w):
    return jax.lax.conv_general_dilated(
        x, w, (1, 1), 'SAME',
        dimension_numbers=('NHWC', 'HWIO', 'NHWC'), precision=_HIGHEST)


def _ref_bilinear(x, out_h, out_w):
    mh = _interp_matrix(out_h, x.shape[1])
    mw = _interp_matrix(out_w, x.shape[2])
    return jnp.einsum('hp,wq,npqc->nhwc', mh, mw, x, precision=_HIGHEST)


def fpn_forward_ref(xs, inner_ws, layer_ws):
    last_inner = _ref_conv1x1(xs[-1], inner_ws[-1])
    results = [_ref_conv3x3(last_inner, layer_ws[-1])]
    for idx in range(len(xs) - 2, -1, -1):
        h, w = xs[idx].shape[1], xs[idx].shape[2]
        td = _ref_bilinear(last_inner, h, w)
        last_inner = _ref_conv1x1(xs[idx], inner_ws[idx]) + td
        results.insert(0, _ref_conv3x3(last_inner, layer_ws[idx]))
    return tuple(results)


# ------------------------------------ main ----------------------------------

if __name__ == "__main__":
    key = jax.random.PRNGKey(0)
    batch = 2
    out_channels = 8
    in_channels_list = [4, 8, 16]
    spatial = [32, 16, 8]          # pyramid: highest resolution first

    nlev = len(in_channels_list)
    keys = jax.random.split(key, 2 * nlev)

    # feature maps (NHWC; equivalent to PyTorch NCHW inputs transposed)
    xs = [
        jax.random.normal(keys[i], (batch, s, s, c), jnp.float32)
        for i, (c, s) in enumerate(zip(in_channels_list, spatial))
    ]

    # deterministic synthetic conv weights (no bias, matching the module)
    inner_ws, layer_ws = [], []
    for i, c in enumerate(in_channels_list):
        ka, kb = jax.random.split(keys[nlev + i])
        inner_ws.append(
            jax.random.normal(ka, (c, out_channels), jnp.float32)
            / np.sqrt(float(c)))
        layer_ws.append(
            jax.random.normal(kb, (3, 3, out_channels, out_channels),
                              jnp.float32)
            / np.sqrt(9.0 * out_channels))

    outs = jax.block_until_ready(fpn_forward(xs, inner_ws, layer_ws))
    refs = fpn_forward_ref(xs, inner_ws, layer_ws)

    for o, r in zip(outs, refs):
        assert o.shape == r.shape, (o.shape, r.shape)
        err = float(jnp.max(jnp.abs(o - r)))
        assert jnp.allclose(o, r, atol=1e-3, rtol=1e-3), err

    print("KERNEL_OK")
</pallas_src>

<mosaic_0001>
module attributes {stable_mosaic.version = 11 : i64} {
  func.func @_fpn_top_kernel(%arg0: i32, %arg1: memref<1x64x16xf32, #tpu.memory_space<vmem>>, %arg2: memref<16x8xf32, #tpu.memory_space<vmem>>, %arg3: memref<3x3x8x8xf32, #tpu.memory_space<vmem>>, %arg4: memref<1x8x8x8xf32, #tpu.memory_space<vmem>>, %arg5: memref<1x8x8x8xf32, #tpu.memory_space<vmem>>, %arg6: memref<10x16x8xf32, #tpu.memory_space<vmem>>) attributes {dimension_semantics = [#tpu.dimension_semantics<parallel>], iteration_bounds = array<i64: 2>, scalar_prefetch = 0 : i64, scratch_operands = 1 : i64, tpu.core_type = #tpu.core_type<tc>, window_params = [{transform_indices = @transform_0, window_bounds = array<i64: 1, 64, 16>}, {pipeline_mode = #tpu.pipeline_mode<synchronous>, transform_indices = @transform_1, window_bounds = array<i64: 16, 8>}, {pipeline_mode = #tpu.pipeline_mode<synchronous>, transform_indices = @transform_2, window_bounds = array<i64: 3, 3, 8, 8>}, {transform_indices = @transform_3, window_bounds = array<i64: 1, 8, 8, 8>}, {transform_indices = @transform_4, window_bounds = array<i64: 1, 8, 8, 8>}]} {
    %c0 = arith.constant 0 : index
    %c0_0 = arith.constant 0 : index
    %c0_1 = arith.constant 0 : index
    %0 = vector.load %arg1[%c0, %c0_0, %c0_1] : memref<1x64x16xf32, #tpu.memory_space<vmem>>, vector<1x64x16xf32>
    %1 = vector.shape_cast %0 : vector<1x64x16xf32> to vector<64x16xf32>
    %c0_2 = arith.constant 0 : index
    %c0_3 = arith.constant 0 : index
    %2 = vector.load %arg2[%c0_2, %c0_3] : memref<16x8xf32, #tpu.memory_space<vmem>>, vector<16x8xf32>
    %cst = arith.constant dense<0.000000e+00> : vector<64x8xf32>
    %3 = tpu.matmul %1, %2, %cst {dimension_numbers = #tpu.dot_dimension_numbers<[1], [0], [0], [1], [0, 0, 1, 1], [], []>} : vector<64x16xf32>, vector<16x8xf32>, vector<64x8xf32> -> vector<64x8xf32>
    %4 = vector.shape_cast %3 : vector<64x8xf32> to vector<8x8x8xf32>
    %c0_4 = arith.constant 0 : index
    %c0_5 = arith.constant 0 : index
    %c0_6 = arith.constant 0 : index
    %c0_7 = arith.constant 0 : index
    %5 = vector.load %arg4[%c0_4, %c0_5, %c0_6, %c0_7] : memref<1x8x8x8xf32, #tpu.memory_space<vmem>>, vector<1x8x8x8xf32>
    %6 = vector.shape_cast %5 : vector<1x8x8x8xf32> to vector<8x8x8xf32>
    %7 = vector.shape_cast %4 : vector<8x8x8xf32> to vector<1x8x8x8xf32>
    tpu.vector_store %arg4[%c0_4, %c0_5, %c0_6, %c0_7], %7 {strides = array<i32>} : memref<1x8x8x8xf32, #tpu.memory_space<vmem>>, vector<1x8x8x8xf32>,
    %cst_8 = arith.constant 0.000000e+00 : f32
    %8 = vector.broadcast %cst_8 : f32 to vector<10x16x8xf32>
    %c0_9 = arith.constant 0 : index
    %c0_10 = arith.constant 0 : index
    %c0_11 = arith.constant 0 : index
    %9 = vector.load %arg6[%c0_9, %c0_10, %c0_11] : memref<10x16x8xf32, #tpu.memory_space<vmem>>, vector<10x16x8xf32>
    tpu.vector_store %arg6[%c0_9, %c0_10, %c0_11], %8 {strides = array<i32>} : memref<10x16x8xf32, #tpu.memory_space<vmem>>, vector<10x16x8xf32>,
    %c1 = arith.constant 1 : index
    %c1_12 = arith.constant 1 : index
    %c0_13 = arith.constant 0 : index
    %10 = vector.load %arg6[%c1, %c1_12, %c0_13] : memref<10x16x8xf32, #tpu.memory_space<vmem>>, vector<8x8x8xf32>
    tpu.vector_store %arg6[%c1, %c1_12, %c0_13], %4 {strides = array<i32>} : memref<10x16x8xf32, #tpu.memory_space<vmem>>, vector<8x8x8xf32>,
    %c0_14 = arith.constant 0 : index
    %c0_15 = arith.constant 0 : index
    %c0_16 = arith.constant 0 : index
    %11 = vector.load %arg6[%c0_14, %c0_15, %c0_16] : memref<10x16x8xf32, #tpu.memory_space<vmem>>, vector<8x16x8xf32>
    %12 = vector.shape_cast %11 : vector<8x16x8xf32> to vector<128x8xf32>
    %c1_17 = arith.constant 1 : index
    %c0_18 = arith.constant 0 : index
    %c0_19 = arith.constant 0 : index
    %13 = vector.load %arg6[%c1_17, %c0_18, %c0_19] : memref<10x16x8xf32, #tpu.memory_space<vmem>>, vector<8x16x8xf32>
    %14 = vector.shape_cast %13 : vector<8x16x8xf32> to vector<128x8xf32>
    %c2 = arith.constant 2 : index
    %c0_20 = arith.constant 0 : index
    %c0_21 = arith.constant 0 : index
    %15 = vector.load %arg6[%c2, %c0_20, %c0_21] : memref<10x16x8xf32, #tpu.memory_space<vmem>>, vector<8x16x8xf32>
    %16 = vector.shape_cast %15 : vector<8x16x8xf32> to vector<128x8xf32>
    %cst_22 = arith.constant 0.000000e+00 : f32
    %17 = vector.broadcast %cst_22 : f32 to vector<8x8x8xf32>
    %cst_23 = arith.constant 0.000000e+00 : f32
    %18 = vector.broadcast %cst_23 : f32 to vector<128x8xf32>
    %c0_24 = arith.constant 0 : index
    %c0_25 = arith.constant 0 : index
    %c0_26 = arith.constant 0 : index
    %c0_27 = arith.constant 0 : index
    %19 = vector.load %arg3[%c0_24, %c0_25, %c0_26, %c0_27] : memref<3x3x8x8xf32, #tpu.memory_space<vmem>>, vector<1x1x8x8xf32>
    %20 = vector.shape_cast %19 : vector<1x1x8x8xf32> to vector<8x8xf32>
    %cst_28 = arith.constant dense<0.000000e+00> : vector<128x8xf32>
    %21 = tpu.matmul %12, %20, %cst_28 {dimension_numbers = #tpu.dot_dimension_numbers<[1], [0], [0], [1], [0, 0, 1, 1], [], []>} : vector<128x8xf32>, vector<8x8xf32>, vector<128x8xf32> -> vector<128x8xf32>
    %22 = arith.addf %18, %21 : vector<128x8xf32>
    %c1_29 = arith.constant 1 : index
    %c0_30 = arith.constant 0 : index
    %c0_31 = arith.constant 0 : index
    %c0_32 = arith.constant 0 : index
    %23 = vector.load %arg3[%c1_29, %c0_30, %c0_31, %c0_32] : memref<3x3x8x8xf32, #tpu.memory_space<vmem>>, vector<1x1x8x8xf32>
    %24 = vector.shape_cast %23 : vector<1x1x8x8xf32> to vector<8x8xf32>
    %cst_33 = arith.constant dense<0.000000e+00> : vector<128x8xf32>
    %25 = tpu.matmul %14, %24, %cst_33 {dimension_numbers = #tpu.dot_dimension_numbers<[1], [0], [0], [1], [0, 0, 1, 1], [], []>} : vector<128x8xf32>, vector<8x8xf32>, vector<128x8xf32> -> vector<128x8xf32>
    %26 = arith.addf %22, %25 : vector<128x8xf32>
    %c2_34 = arith.constant 2 : index
    %c0_35 = arith.constant 0 : index
    %c0_36 = arith.constant 0 : index
    %c0_37 = arith.constant 0 : index
    %27 = vector.load %arg3[%c2_34, %c0_35, %c0_36, %c0_37] : memref<3x3x8x8xf32, #tpu.memory_space<vmem>>, vector<1x1x8x8xf32>
    %28 = vector.shape_cast %27 : vector<1x1x8x8xf32> to vector<8x8xf32>
    %cst_38 = arith.constant dense<0.000000e+00> : vector<128x8xf32>
    %29 = tpu.matmul %16, %28, %cst_38 {dimension_numbers = #tpu.dot_dimension_numbers<[1], [0], [0], [1], [0, 0, 1, 1], [], []>} : vector<128x8xf32>, vector<8x8xf32>, vector<128x8xf32> -> vector<128x8xf32>
    %30 = arith.addf %26, %29 : vector<128x8xf32>
    %31 = vector.shape_cast %30 : vector<128x8xf32> to vector<8x16x8xf32>
    %32 = vector.extract_strided_slice %31 {offsets = [0, 0, 0], sizes = [8, 8, 8], strides = [1, 1, 1]} : vector<8x16x8xf32> to vector<8x8x8xf32>
    %33 = arith.addf %17, %32 : vector<8x8x8xf32>
    %cst_39 = arith.constant 0.000000e+00 : f32
    %34 = vector.broadcast %cst_39 : f32 to vector<128x8xf32>
    %c0_40 = arith.constant 0 : index
    %c1_41 = arith.constant 1 : index
    %c0_42 = arith.constant 0 : index
    %c0_43 = arith.constant 0 : index
    %35 = vector.load %arg3[%c0_40, %c1_41, %c0_42, %c0_43] : memref<3x3x8x8xf32, #tpu.memory_space<vmem>>, vector<1x1x8x8xf32>
    %36 = vector.shape_cast %35 : vector<1x1x8x8xf32> to vector<8x8xf32>
    %cst_44 = arith.constant dense<0.000000e+00> : vector<128x8xf32>
    %37 = tpu.matmul %12, %36, %cst_44 {dimension_numbers = #tpu.dot_dimension_numbers<[1], [0], [0], [1], [0, 0, 1, 1], [], []>} : vector<128x8xf32>, vector<8x8xf32>, vector<128x8xf32> -> vector<128x8xf32>
    %38 = arith.addf %34, %37 : vector<128x8xf32>
    %c1_45 = arith.constant 1 : index
    %c1_46 = arith.constant 1 : index
    %c0_47 = arith.constant 0 : index
    %c0_48 = arith.constant 0 : index
    %39 = vector.load %arg3[%c1_45, %c1_46, %c0_47, %c0_48] : memref<3x3x8x8xf32, #tpu.memory_space<vmem>>, vector<1x1x8x8xf32>
    %40 = vector.shape_cast %39 : vector<1x1x8x8xf32> to vector<8x8xf32>
    %cst_49 = arith.constant dense<0.000000e+00> : vector<128x8xf32>
    %41 = tpu.matmul %14, %40, %cst_49 {dimension_numbers = #tpu.dot_dimension_numbers<[1], [0], [0], [1], [0, 0, 1, 1], [], []>} : vector<128x8xf32>, vector<8x8xf32>, vector<128x8xf32> -> vector<128x8xf32>
    %42 = arith.addf %38, %41 : vector<128x8xf32>
    %c2_50 = arith.constant 2 : index
    %c1_51 = arith.constant 1 : index
    %c0_52 = arith.constant 0 : index
    %c0_53 = arith.constant 0 : index
    %43 = vector.load %arg3[%c2_50, %c1_51, %c0_52, %c0_53] : memref<3x3x8x8xf32, #tpu.memory_space<vmem>>, vector<1x1x8x8xf32>
    %44 = vector.shape_cast %43 : vector<1x1x8x8xf32> to vector<8x8xf32>
    %cst_54 = arith.constant dense<0.000000e+00> : vector<128x8xf32>
    %45 = tpu.matmul %16, %44, %cst_54 {dimension_numbers = #tpu.dot_dimension_numbers<[1], [0], [0], [1], [0, 0, 1, 1], [], []>} : vector<128x8xf32>, vector<8x8xf32>, vector<128x8xf32> -> vector<128x8xf32>
    %46 = arith.addf %42, %45 : vector<128x8xf32>
    %47 = vector.shape_cast %46 : vector<128x8xf32> to vector<8x16x8xf32>
    %48 = vector.extract_strided_slice %47 {offsets = [0, 1, 0], sizes = [8, 8, 8], strides = [1, 1, 1]} : vector<8x16x8xf32> to vector<8x8x8xf32>
    %49 = arith.addf %33, %48 : vector<8x8x8xf32>
    %cst_55 = arith.constant 0.000000e+00 : f32
    %50 = vector.broadcast %cst_55 : f32 to vector<128x8xf32>
    %c0_56 = arith.constant 0 : index
    %c2_57 = arith.constant 2 : index
    %c0_58 = arith.constant 0 : index
    %c0_59 = arith.constant 0 : index
    %51 = vector.load %arg3[%c0_56, %c2_57, %c0_58, %c0_59] : memref<3x3x8x8xf32, #tpu.memory_space<vmem>>, vector<1x1x8x8xf32>
    %52 = vector.shape_cast %51 : vector<1x1x8x8xf32> to vector<8x8xf32>
    %cst_60 = arith.constant dense<0.000000e+00> : vector<128x8xf32>
    %53 = tpu.matmul %12, %52, %cst_60 {dimension_numbers = #tpu.dot_dimension_numbers<[1], [0], [0], [1], [0, 0, 1, 1], [], []>} : vector<128x8xf32>, vector<8x8xf32>, vector<128x8xf32> -> vector<128x8xf32>
    %54 = arith.addf %50, %53 : vector<128x8xf32>
    %c1_61 = arith.constant 1 : index
    %c2_62 = arith.constant 2 : index
    %c0_63 = arith.constant 0 : index
    %c0_64 = arith.constant 0 : index
    %55 = vector.load %arg3[%c1_61, %c2_62, %c0_63, %c0_64] : memref<3x3x8x8xf32, #tpu.memory_space<vmem>>, vector<1x1x8x8xf32>
    %56 = vector.shape_cast %55 : vector<1x1x8x8xf32> to vector<8x8xf32>
    %cst_65 = arith.constant dense<0.000000e+00> : vector<128x8xf32>
    %57 = tpu.matmul %14, %56, %cst_65 {dimension_numbers = #tpu.dot_dimension_numbers<[1], [0], [0], [1], [0, 0, 1, 1], [], []>} : vector<128x8xf32>, vector<8x8xf32>, vector<128x8xf32> -> vector<128x8xf32>
    %58 = arith.addf %54, %57 : vector<128x8xf32>
    %c2_66 = arith.constant 2 : index
    %c2_67 = arith.constant 2 : index
    %c0_68 = arith.constant 0 : index
    %c0_69 = arith.constant 0 : index
    %59 = vector.load %arg3[%c2_66, %c2_67, %c0_68, %c0_69] : memref<3x3x8x8xf32, #tpu.memory_space<vmem>>, vector<1x1x8x8xf32>
    %60 = vector.shape_cast %59 : vector<1x1x8x8xf32> to vector<8x8xf32>
    %cst_70 = arith.constant dense<0.000000e+00> : vector<128x8xf32>
    %61 = tpu.matmul %16, %60, %cst_70 {dimension_numbers = #tpu.dot_dimension_numbers<[1], [0], [0], [1], [0, 0, 1, 1], [], []>} : vector<128x8xf32>, vector<8x8xf32>, vector<128x8xf32> -> vector<128x8xf32>
    %62 = arith.addf %58, %61 : vector<128x8xf32>
    %63 = vector.shape_cast %62 : vector<128x8xf32> to vector<8x16x8xf32>
    %64 = vector.extract_strided_slice %63 {offsets = [0, 2, 0], sizes = [8, 8, 8], strides = [1, 1, 1]} : vector<8x16x8xf32> to vector<8x8x8xf32>
    %65 = arith.addf %49, %64 : vector<8x8x8xf32>
    %c0_71 = arith.constant 0 : index
    %c0_72 = arith.constant 0 : index
    %c0_73 = arith.constant 0 : index
    %c0_74 = arith.constant 0 : index
    %66 = vector.load %arg5[%c0_71, %c0_72, %c0_73, %c0_74] : memref<1x8x8x8xf32, #tpu.memory_space<vmem>>, vector<1x8x8x8xf32>
    %67 = vector.shape_cast %66 : vector<1x8x8x8xf32> to vector<8x8x8xf32>
    %68 = vector.shape_cast %65 : vector<8x8x8xf32> to vector<1x8x8x8xf32>
    tpu.vector_store %arg5[%c0_71, %c0_72, %c0_73, %c0_74], %68 {strides = array<i32>} : memref<1x8x8x8xf32, #tpu.memory_space<vmem>>, vector<1x8x8x8xf32>,
    return
  }
  func.func @transform_0(%arg0: i32) -> (i32, i32, i32) {
    %c0_i32 = arith.constant 0 : i32
    %c0_i32_0 = arith.constant 0 : i32
    %c0_i32_1 = arith.constant 0 : i32
    return %arg0, %c0_i32, %c0_i32_0 : i32, i32, i32
  }
  func.func @transform_1(%arg0: i32) -> (i32, i32) {
    %c0_i32 = arith.constant 0 : i32
    %c0_i32_0 = arith.constant 0 : i32
    %c0_i32_1 = arith.constant 0 : i32
    return %c0_i32, %c0_i32_0 : i32, i32
  }
  func.func @transform_2(%arg0: i32) -> (i32, i32, i32, i32) {
    %c0_i32 = arith.constant 0 : i32
    %c0_i32_0 = arith.constant 0 : i32
    %c0_i32_1 = arith.constant 0 : i32
    %c0_i32_2 = arith.constant 0 : i32
    %c0_i32_3 = arith.constant 0 : i32
    return %c0_i32, %c0_i32_0, %c0_i32_1, %c0_i32_2 : i32, i32, i32, i32
  }
  func.func @transform_3(%arg0: i32) -> (i32, i32, i32, i32) {
    %c0_i32 = arith.constant 0 : i32
    %c0_i32_0 = arith.constant 0 : i32
    %c0_i32_1 = arith.constant 0 : i32
    %c0_i32_2 = arith.constant 0 : i32
    return %arg0, %c0_i32, %c0_i32_0, %c0_i32_1 : i32, i32, i32, i32
  }
  func.func @transform_4(%arg0: i32) -> (i32, i32, i32, i32) {
    %c0_i32 = arith.constant 0 : i32
    %c0_i32_0 = arith.constant 0 : i32
    %c0_i32_1 = arith.constant 0 : i32
    %c0_i32_2 = arith.constant 0 : i32
    return %arg0, %c0_i32, %c0_i32_0, %c0_i32_1 : i32, i32, i32, i32
  }
}

</mosaic_0001>

<llo_original>
// kernel: tpu_custom_call.1
$region0: #{tpu_custom_call.1}
  #allocation0 [shape = 'u32[]', space=smem, size = 0x4, offset = 0x4, fixed_abs, tag = 'smem constant byte address 0x4 - core index']
  #allocation1 [shape = 'u32[72,128]{1,0:T(1,128)}', space=vmem, size = 0x9000, scoped, tag = 'internal scratch']
  #allocation2 [shape = 'f32[10,16,8]{2,1,0:T(8,128)}', space=vmem, size = 0x14000, scoped, tag = 'scratch operand']
  %s0 = inlined_call_operand.vmem [shape: f32[2,64,16], index: 0, kind: input, shape index: {}]
  %s1 = inlined_call_operand.vmem [shape: f32[16,8], index: 1, kind: input, shape index: {}]
  %s2 = inlined_call_operand.vmem [shape: f32[3,3,8,8], index: 2, kind: input, shape index: {}]
  %s3 = inlined_call_operand.hbm [shape: f32[2,8,8,8], index: 3, kind: output, shape index: {0}]
  %s4 = inlined_call_operand.hbm [shape: f32[2,8,8,8], index: 4, kind: output, shape index: {1}]
  %5 = xla_tuple %s3, %s4
  %s6 = sld [smem:[#allocation0]]
  $region53: #{tpu_custom_call.1} parent=0
    _
  %s8 = ssub.s32 1, %s6
  %s9 = scalar_select 0, %s8, %s6
  $region1: #{tpu_custom_call.1} parent=0
    #allocation3 [shape = 'u8[65536]{0}', space=vmem, size = 0x10000, scoped, tag = 'output window, operand 0']
    #allocation4 [shape = 's32[2]{0}', space=sflag, size = 0x8, scoped, tag = 'scoped memory for tpu_custom_call.1']
    #allocation5 [shape = 'u8[65536]{0}', space=vmem, size = 0x10000, scoped, tag = 'output window, operand 1']
    #allocation6 [shape = 's32[2]{0}', space=sflag, size = 0x8, scoped, tag = 'scoped memory for tpu_custom_call.1']
    %10 = vsyncpa [#allocation4], 0
    %s11 = scalar_lea.sflag [#allocation4], 1
    %12 = vsyncpa %s11, 0
    %13 = vsyncpa [#allocation6], 0
    %s14 = scalar_lea.sflag [#allocation6], 1
    %15 = vsyncpa %s14, 0
    loop: start=0, step=1, limit=4
    $region2: #{tpu_custom_call.1} parent=1 // loop_pre_header
      _
    $region3: #{tpu_custom_call.1} parent=1 // loop_header
      %s17 = sphi 0, %s21
      %p18 = scmp.ge.s32.totalorder %s17, 4
      %s27 = sphi 0, %s29
      %s30 = sphi 0, %s27
      %s31 = sphi 0, %s30
      %s47 = sphi 0, %s31
      %s51 = sphi 0, %s51
      %s53 = sphi 0, %s51
      %s54 = sphi 0, %s53
      %s68 = sphi 0, %s54
      %s72 = sphi 0, %s72
      %s74 = sphi 0, %s72
      %s75 = sphi 0, %s74
      %s89 = sphi 0, %s75
      %s95 = sphi 0, %s97
      %s98 = sphi 0, %s95
      %s99 = sphi 0, %s98
      %s115 = sphi 0, %s99
      %s121 = sphi 0, %s123
      %s124 = sphi 0, %s121
      %s125 = sphi 0, %s124
      %s141 = sphi 0, %s125
    $region4: #{tpu_custom_call.1} parent=1 // loop_header_branch
      %20 = sbr.rel (%p18) target = $region8
    $region5: #{tpu_custom_call.1} parent=1 // loop_body
      %s22 = ssub.s32 %s17, 1
      %s23 = ssub.s32 %s17, 2
      %s24 = sadd.s32 %s17, 1
      %s25 = ssub.s32 %s17, %s24
      %p26 = scmp.eq.s32.totalorder %s25, 0
      %s28 = sadd.s32 %s27, 1
      %s29 = scalar_select %p26, %s27, %s28
      %p32 = pneg %p26
      %p33 = scmp.eq.s32.totalorder %s17, 1
      %p34 = por %p32, %p33
      %p35 = scmp.ne.s32.totalorder %s27, %s30
      %p36 = scmp.eq.s32.totalorder %s17, 0
      %p37 = por %p35, %p36
      %p38 = scmp.ne.s32.totalorder %s27, %s30
      %p39 = scmp.eq.s32.totalorder %s22, 1
      %p40 = por %p38, %p39
      %p41 = scmp.ne.s32.totalorder %s30, %s31
      %p42 = scmp.eq.s32.totalorder %s22, 0
      %p43 = por %p41, %p42
      %p44 = scmp.ne.s32.totalorder %s30, %s31
      %p45 = scmp.eq.s32.totalorder %s23, 1
      %p46 = por %p44, %p45
      %p48 = scmp.ne.s32.totalorder %s31, %s47
      %p49 = scmp.eq.s32.totalorder %s23, 0
      %p50 = por %p48, %p49
      %s52 = sadd.s32 %s51, 1
      %p55 = scmp.eq.s32.totalorder %s17, 1
      %p56 = scmp.ne.s32.totalorder %s51, %s53
      %p57 = scmp.eq.s32.totalorder %s17, 0
      %p58 = por %p56, %p57
      %p59 = scmp.ne.s32.totalorder %s51, %s53
      %p60 = scmp.eq.s32.totalorder %s22, 1
      %p61 = por %p59, %p60
      %p62 = scmp.ne.s32.totalorder %s53, %s54
      %p63 = scmp.eq.s32.totalorder %s22, 0
      %p64 = por %p62, %p63
      %p65 = scmp.ne.s32.totalorder %s53, %s54
      %p66 = scmp.eq.s32.totalorder %s23, 1
      %p67 = por %p65, %p66
      %p69 = scmp.ne.s32.totalorder %s54, %s68
      %p70 = scmp.eq.s32.totalorder %s23, 0
      %p71 = por %p69, %p70
      %s73 = sadd.s32 %s72, 1
      %p76 = scmp.eq.s32.totalorder %s17, 1
      %p77 = scmp.ne.s32.totalorder %s72, %s74
      %p78 = scmp.eq.s32.totalorder %s17, 0
      %p79 = por %p77, %p78
      %p80 = scmp.ne.s32.totalorder %s72, %s74
      %p81 = scmp.eq.s32.totalorder %s22, 1
      %p82 = por %p80, %p81
      %p83 = scmp.ne.s32.totalorder %s74, %s75
      %p84 = scmp.eq.s32.totalorder %s22, 0
      %p85 = por %p83, %p84
      %p86 = scmp.ne.s32.totalorder %s74, %s75
      %p87 = scmp.eq.s32.totalorder %s23, 1
      %p88 = por %p86, %p87
      %p90 = scmp.ne.s32.totalorder %s75, %s89
      %p91 = scmp.eq.s32.totalorder %s23, 0
      %p92 = por %p90, %p91
      %s93 = ssub.s32 %s17, %s24
      %p94 = scmp.eq.s32.totalorder %s93, 0
      %s96 = sadd.s32 %s95, 1
      %s97 = scalar_select %p94, %s95, %s96
      %p100 = pneg %p94
      %p101 = scmp.eq.s32.totalorder %s17, 1
      %p102 = por %p100, %p101
      %p103 = scmp.ne.s32.totalorder %s95, %s98
      %p104 = scmp.eq.s32.totalorder %s17, 0
      %p105 = por %p103, %p104
      %p106 = scmp.ne.s32.totalorder %s95, %s98
      %p107 = scmp.eq.s32.totalorder %s22, 1
      %p108 = por %p106, %p107
      %p109 = scmp.ne.s32.totalorder %s98, %s99
      %p110 = scmp.eq.s32.totalorder %s22, 0
      %p111 = por %p109, %p110
      %p112 = scmp.ne.s32.totalorder %s98, %s99
      %p113 = scmp.eq.s32.totalorder %s23, 1
      %p114 = por %p112, %p113
      %p116 = scmp.ne.s32.totalorder %s99, %s115
      %p117 = scmp.eq.s32.totalorder %s23, 0
      %p118 = por %p116, %p117
      %s119 = ssub.s32 %s17, %s24
      %p120 = scmp.eq.s32.totalorder %s119, 0
      %s122 = sadd.s32 %s121, 1
      %s123 = scalar_select %p120, %s121, %s122
      %p126 = pneg %p120
      %p127 = scmp.eq.s32.totalorder %s17, 1
      %p128 = por %p126, %p127
      %p129 = scmp.ne.s32.totalorder %s121, %s124
      %p130 = scmp.eq.s32.totalorder %s17, 0
      %p131 = por %p129, %p130
      %p132 = scmp.ne.s32.totalorder %s121, %s124
      %p133 = scmp.eq.s32.totalorder %s22, 1
      %p134 = por %p132, %p133
      %p135 = scmp.ne.s32.totalorder %s124, %s125
      %p136 = scmp.eq.s32.totalorder %s22, 0
      %p137 = por %p135, %p136
      %p138 = scmp.ne.s32.totalorder %s124, %s125
      %p139 = scmp.eq.s32.totalorder %s23, 1
      %p140 = por %p138, %p139
      %p142 = scmp.ne.s32.totalorder %s125, %s141
      %p143 = scmp.eq.s32.totalorder %s23, 0
      %p144 = por %p142, %p143
      %p145 = scmp.le.s32.totalorder 1, %s17
      %p146 = scmp.lt.s32.totalorder %s17, 3
      %p147 = pnand %p145, %p146
      %p148 = pneg %p147
      // Predicated region
      $region9: #{tpu_custom_call.1} parent=5 // pred_check
        _
      $region10: #{tpu_custom_call.1} parent=5 // pred_check_branch
        %150 = sbr.rel (%p147) target = $region12
      $region11: #{tpu_custom_call.1} parent=5 // pred_region
        %s151 = ssub.s32 %s17, 1
        // Predicated region
        $region13: #{tpu_custom_call.1} parent=11 // pred_check
          %p152 = pneg %p64
        $region14: #{tpu_custom_call.1} parent=11 // pred_check_branch
          %154 = sbr.rel (%p152) target = $region16
        $region15: #{tpu_custom_call.1} parent=11 // pred_region
          _
        $region16: #{tpu_custom_call.1} parent=11 // pred_fallthru
          _
        // Predicated region
        $region17: #{tpu_custom_call.1} parent=11 // pred_check
          %p155 = pneg %p85
        $region18: #{tpu_custom_call.1} parent=11 // pred_check_branch
          %157 = sbr.rel (%p155) target = $region20
        $region19: #{tpu_custom_call.1} parent=11 // pred_region
          _
        $region20: #{tpu_custom_call.1} parent=11 // pred_fallthru
          _
      $region12: #{tpu_custom_call.1} parent=5 // pred_fallthru
        _
      %p158 = scmp.lt.s32.totalorder %s17, 2
      // Predicated region
      $region21: #{tpu_custom_call.1} parent=5 // pred_check
        %p159 = pneg %p158
      $region22: #{tpu_custom_call.1} parent=5 // pred_check_branch
        %161 = sbr.rel (%p159) target = $region24
      $region23: #{tpu_custom_call.1} parent=5 // pred_region
        // Predicated region
        $region25: #{tpu_custom_call.1} parent=23 // pred_check
          %p162 = pneg %p37
        $region26: #{tpu_custom_call.1} parent=23 // pred_check_branch
          %164 = sbr.rel (%p162) target = $region28
        $region27: #{tpu_custom_call.1} parent=23 // pred_region
          %p165 = scmp.lt.s32.totalorder %s17, 1
          %s166 = scalar_select %p165, %s17, 1
          %s167 = smul.addr %s166, 8
          %s168 = smul.addr %s167, 8
          %s169 = scalar_lea.vmem %s0, %s168
        $region28: #{tpu_custom_call.1} parent=23 // pred_fallthru
          _
      $region24: #{tpu_custom_call.1} parent=5 // pred_fallthru
        _
      %p170 = scmp.le.s32.totalorder 1, %s17
      %p171 = scmp.lt.s32.totalorder %s17, 3
      %p172 = pnand %p170, %p171
      %p173 = pneg %p172
      // Predicated region
      $region29: #{tpu_custom_call.1} parent=5 // pred_check
        _
      $region30: #{tpu_custom_call.1} parent=5 // pred_check_branch
        %175 = sbr.rel (%p172) target = $region32
      $region31: #{tpu_custom_call.1} parent=5 // pred_region
        %s176 = ssub.s32 %s17, 1
        %p177 = scmp.lt.s32.totalorder %s22, 1
        %s178 = scalar_select %p177, %s22, 1
        %s179 = smul.addr %s178, 8
        %s180 = smul.addr %s179, 8
        %s181 = scalar_lea.vmem %s0, %s180
        %p182 = pneg %p43
        %p183 = pneg %p40
        %p184 = pneg %p64
        %p185 = pneg %p61
        %p186 = pneg %p85
        %p187 = pneg %p82
        %p188 = pneg %p111
        %p189 = pneg %p108
        %s190 = sand.u32 %s98, 1
        %s191 = scalar_lea.sflag [#allocation4], %s190
        %s192 = sand.u32 %s98, 1
        %s193 = smul.addr %s192, 64
        %s194 = scalar_lea.vmem [#allocation3], %s193
        %p195 = pneg %p137
        %p196 = pneg %p134
        %s197 = sand.u32 %s124, 1
        %s198 = scalar_lea.sflag [#allocation6], %s197
        %s199 = sand.u32 %s124, 1
        %s200 = smul.addr %s199, 64
        %s201 = scalar_lea.vmem [#allocation5], %s200
        %p202 = scmp.lt.s32.totalorder %s22, 1
        %s203 = scalar_select %p202, %s22, 1
        %s204 = smul.addr %s203, 8
        %s205 = smul.addr %s204, 8
        %s206 = scalar_lea.vmem %s0, %s205
        %v207 = vld [vmem:[%s206] sm:$0xff]
        %v208 = vld [vmem:[%s206 + $0x8] sm:$0xff]
        %v209 = vld [vmem:[%s206 + $0x10] sm:$0xff]
        %v210 = vld [vmem:[%s206 + $0x18] sm:$0xff]
        %v211 = vld [vmem:[%s206 + $0x20] sm:$0xff]
        %v212 = vld [vmem:[%s206 + $0x28] sm:$0xff]
        %v213 = vld [vmem:[%s206 + $0x30] sm:$0xff]
        %v214 = vld [vmem:[%s206 + $0x38] sm:$0xff]
        %v215 = vld [vmem:[%s1] sm:$0xff]
        %v216 = vld [vmem:[%s1 + $0x8] sm:$0xff]
        %vm217 = vcmask 130048
        %v219 = vsel %vm217, %v207, 0
        %v222 = vsel %vm217, %v208, 0
        %v225 = vsel %vm217, %v209, 0
        %v228 = vsel %vm217, %v210, 0
        %v231 = vsel %vm217, %v211, 0
        %v234 = vsel %vm217, %v212, 0
        %v237 = vsel %vm217, %v213, 0
        %v240 = vsel %vm217, %v214, 0
        %242 = vmatpush.msra.mxu0 0.0
        %243 = vmatpush.msra.mxu0 0.0
        %244 = vmatpush.msra.mxu0 0.0
        %245 = vmatpush.msra.mxu0 0.0
        %246 = vmatpush.msra.mxu0 0.0
        %247 = vmatpush.msra.mxu0 0.0
        %248 = vmatpush.msra.mxu0 0.0
        %249 = vmatpush.msra.mxu0 0.0
        %250 = vmatpush.msra.mxu0 0.0
        %251 = vmatpush.msra.mxu0 0.0
        %252 = vmatpush.msra.mxu0 0.0
        %253 = vmatpush.msra.mxu0 0.0
        %254 = vmatpush.msra.mxu0 0.0
        %255 = vmatpush.msra.mxu0 0.0
        %256 = vmatpush.msra.mxu0 %v216
        %257 = vmatpush.msra.mxu0 %v215
        %258 = vmatmul.f32.gmra.mxu0 %v219
        %v259 = vpop.f32.mrf.mxu0
        %v260 = vadd.f32 0.0, %v259
        %261 = vmatmul.f32.gmra.mxu0 %v222
        %v262 = vpop.f32.mrf.mxu0
        %v263 = vadd.f32 0.0, %v262
        %264 = vmatmul.f32.gmra.mxu0 %v225
        %v265 = vpop.f32.mrf.mxu0
        %v266 = vadd.f32 0.0, %v265
        %267 = vmatmul.f32.gmra.mxu0 %v228
        %v268 = vpop.f32.mrf.mxu0
        %v269 = vadd.f32 0.0, %v268
        %270 = vmatmul.f32.gmra.mxu0 %v231
        %v271 = vpop.f32.mrf.mxu0
        %v272 = vadd.f32 0.0, %v271
        %273 = vmatmul.f32.gmra.mxu0 %v234
        %v274 = vpop.f32.mrf.mxu0
        %v275 = vadd.f32 0.0, %v274
        %276 = vmatmul.f32.gmra.mxu0 %v237
        %v277 = vpop.f32.mrf.mxu0
        %v278 = vadd.f32 0.0, %v277
        %279 = vmatmul.f32.gmra.mxu0 %v240
        %v280 = vpop.f32.mrf.mxu0
        %v281 = vadd.f32 0.0, %v280
        %282 = vdwg.mxu0
        %vm283 = vcmask 64512
        %284 = vst.msk [vmem:[%s194] sm:$0xff] %vm283, %v260
        %285 = vst.msk [vmem:[%s194 + $0x8] sm:$0xff] %vm283, %v263
        %286 = vst.msk [vmem:[%s194 + $0x10] sm:$0xff] %vm283, %v266
        %287 = vst.msk [vmem:[%s194 + $0x18] sm:$0xff] %vm283, %v269
        %288 = vst.msk [vmem:[%s194 + $0x20] sm:$0xff] %vm283, %v272
        %289 = vst.msk [vmem:[%s194 + $0x28] sm:$0xff] %vm283, %v275
        %290 = vst.msk [vmem:[%s194 + $0x30] sm:$0xff] %vm283, %v278
        %291 = vst.msk [vmem:[%s194 + $0x38] sm:$0xff] %vm283, %v281
        %292 = vst.msk [vmem:[#allocation2] sm:$0xff] %vm283, 0.0
        %293 = vst.msk [vmem:[#allocation2 + $0x8] sm:$0xff] %vm283, 0.0
        %294 = vst.msk [vmem:[#allocation2 + $0x10] sm:$0xff] %vm283, 0.0
        %295 = vst.msk [vmem:[#allocation2 + $0x18] sm:$0xff] %vm283, 0.0
        %296 = vst.msk [vmem:[#allocation2 + $0x20] sm:$0xff] %vm283, 0.0
        %297 = vst.msk [vmem:[#allocation2 + $0x28] sm:$0xff] %vm283, 0.0
        %298 = vst.msk [vmem:[#allocation2 + $0x30] sm:$0xff] %vm283, 0.0
        %299 = vst.msk [vmem:[#allocation2 + $0x38] sm:$0xff] %vm283, 0.0
        %300 = vst.msk [vmem:[#allocation2 + $0x40] sm:$0xff] %vm283, 0.0
        %301 = vst.msk [vmem:[#allocation2 + $0x48] sm:$0xff] %vm283, 0.0
        %302 = vst.msk [vmem:[#allocation2 + $0x50] sm:$0xff] %vm283, 0.0
        %303 = vst.msk [vmem:[#allocation2 + $0x58] sm:$0xff] %vm283, 0.0
        %304 = vst.msk [vmem:[#allocation2 + $0x60] sm:$0xff] %vm283, 0.0
        %305 = vst.msk [vmem:[#allocation2 + $0x68] sm:$0xff] %vm283, 0.0
        %306 = vst.msk [vmem:[#allocation2 + $0x70] sm:$0xff] %vm283, 0.0
        %307 = vst.msk [vmem:[#allocation2 + $0x78] sm:$0xff] %vm283, 0.0
        %308 = vst.msk [vmem:[#allocation2 + $0x80] sm:$0xff] %vm283, 0.0
        %309 = vst.msk [vmem:[#allocation2 + $0x88] sm:$0xff] %vm283, 0.0
        %310 = vst.msk [vmem:[#allocation2 + $0x90] sm:$0xff] %vm283, 0.0
        %311 = vst.msk [vmem:[#allocation2 + $0x98] sm:$0xff] %vm283, 0.0
        %s312 = scalar_lea.vmem [#allocation2], 16
        %313 = vst.msk [vmem:[%s312 + $0x1] sm:$0xff] %vm283, %v260
        %314 = vst.msk [vmem:[%s312 + $0x11] sm:$0xff] %vm283, %v263
        %315 = vst.msk [vmem:[%s312 + $0x21] sm:$0xff] %vm283, %v266
        %316 = vst.msk [vmem:[%s312 + $0x31] sm:$0xff] %vm283, %v269
        %317 = vst.msk [vmem:[%s312 + $0x41] sm:$0xff] %vm283, %v272
        %318 = vst.msk [vmem:[%s312 + $0x51] sm:$0xff] %vm283, %v275
        %319 = vst.msk [vmem:[%s312 + $0x61] sm:$0xff] %vm283, %v278
        %320 = vst.msk [vmem:[%s312 + $0x71] sm:$0xff] %vm283, %v281
        %v321 = vld [vmem:[#allocation2] sm:$0xff]
        %v322 = vld [vmem:[#allocation2 + $0x8] sm:$0xff]
        %v323 = vld [vmem:[#allocation2 + $0x10] sm:$0xff]
        %v324 = vld [vmem:[#allocation2 + $0x18] sm:$0xff]
        %v325 = vld [vmem:[#allocation2 + $0x20] sm:$0xff]
        %v326 = vld [vmem:[#allocation2 + $0x28] sm:$0xff]
        %v327 = vld [vmem:[#allocation2 + $0x30] sm:$0xff]
        %v328 = vld [vmem:[#allocation2 + $0x38] sm:$0xff]
        %v329 = vld [vmem:[#allocation2 + $0x40] sm:$0xff]
        %v330 = vld [vmem:[#allocation2 + $0x48] sm:$0xff]
        %v331 = vld [vmem:[#allocation2 + $0x50] sm:$0xff]
        %v332 = vld [vmem:[#allocation2 + $0x58] sm:$0xff]
        %v333 = vld [vmem:[#allocation2 + $0x60] sm:$0xff]
        %v334 = vld [vmem:[#allocation2 + $0x68] sm:$0xff]
        %v335 = vld [vmem:[#allocation2 + $0x70] sm:$0xff]
        %v336 = vld [vmem:[#allocation2 + $0x78] sm:$0xff]
        %v337 = vld [vmem:[%s312] sm:$0xff]
        %v338 = vld [vmem:[%s312 + $0x8] sm:$0xff]
        %v339 = vld [vmem:[%s312 + $0x10] sm:$0xff]
        %v340 = vld [vmem:[%s312 + $0x18] sm:$0xff]
        %v341 = vld [vmem:[%s312 + $0x20] sm:$0xff]
        %v342 = vld [vmem:[%s312 + $0x28] sm:$0xff]
        %v343 = vld [vmem:[%s312 + $0x30] sm:$0xff]
        %v344 = vld [vmem:[%s312 + $0x38] sm:$0xff]
        %v345 = vld [vmem:[%s312 + $0x40] sm:$0xff]
        %v346 = vld [vmem:[%s312 + $0x48] sm:$0xff]
        %v347 = vld [vmem:[%s312 + $0x50] sm:$0xff]
        %v348 = vld [vmem:[%s312 + $0x58] sm:$0xff]
        %v349 = vld [vmem:[%s312 + $0x60] sm:$0xff]
        %v350 = vld [vmem:[%s312 + $0x68] sm:$0xff]
        %v351 = vld [vmem:[%s312 + $0x70] sm:$0xff]
        %v352 = vld [vmem:[%s312 + $0x78] sm:$0xff]
        %s353 = scalar_lea.vmem [#allocation2], 32
        %v354 = vld [vmem:[%s353] sm:$0xff]
        %v355 = vld [vmem:[%s353 + $0x8] sm:$0xff]
        %v356 = vld [vmem:[%s353 + $0x10] sm:$0xff]
        %v357 = vld [vmem:[%s353 + $0x18] sm:$0xff]
        %v358 = vld [vmem:[%s353 + $0x20] sm:$0xff]
        %v359 = vld [vmem:[%s353 + $0x28] sm:$0xff]
        %v360 = vld [vmem:[%s353 + $0x30] sm:$0xff]
        %v361 = vld [vmem:[%s353 + $0x38] sm:$0xff]
        %v362 = vld [vmem:[%s353 + $0x40] sm:$0xff]
        %v363 = vld [vmem:[%s353 + $0x48] sm:$0xff]
        %v364 = vld [vmem:[%s353 + $0x50] sm:$0xff]
        %v365 = vld [vmem:[%s353 + $0x58] sm:$0xff]
        %v366 = vld [vmem:[%s353 + $0x60] sm:$0xff]
        %v367 = vld [vmem:[%s353 + $0x68] sm:$0xff]
        %v368 = vld [vmem:[%s353 + $0x70] sm:$0xff]
        %v369 = vld [vmem:[%s353 + $0x78] sm:$0xff]
        %v370 = vld [vmem:[%s2] sm:$0xff]
        %s371 = scalar_lea.vmem %s2, 24
        %v372 = vld [vmem:[%s371] sm:$0xff]
        %v374 = vsel %vm283, %v337, 0
        %v377 = vsel %vm283, %v338, 0
        %v380 = vsel %vm283, %v339, 0
        %v383 = vsel %vm283, %v340, 0
        %v386 = vsel %vm283, %v341, 0
        %v389 = vsel %vm283, %v342, 0
        %v392 = vsel %vm283, %v343, 0
        %v395 = vsel %vm283, %v344, 0
        %v398 = vsel %vm283, %v345, 0
        %v401 = vsel %vm283, %v346, 0
        %v404 = vsel %vm283, %v347, 0
        %v407 = vsel %vm283, %v348, 0
        %v410 = vsel %vm283, %v349, 0
        %v413 = vsel %vm283, %v350, 0
        %v416 = vsel %vm283, %v351, 0
        %v419 = vsel %vm283, %v352, 0
        %421 = vmatpush.msra.mxu0 0.0
        %422 = vmatpush.msra.mxu0 0.0
        %423 = vmatpush.msra.mxu0 0.0
        %424 = vmatpush.msra.mxu0 0.0
        %425 = vmatpush.msra.mxu0 0.0
        %426 = vmatpush.msra.mxu0 0.0
        %427 = vmatpush.msra.mxu0 0.0
        %428 = vmatpush.msra.mxu0 0.0
        %429 = vmatpush.msra.mxu0 0.0
        %430 = vmatpush.msra.mxu0 0.0
        %431 = vmatpush.msra.mxu0 0.0
        %432 = vmatpush.msra.mxu0 0.0
        %433 = vmatpush.msra.mxu0 0.0
        %434 = vmatpush.msra.mxu0 0.0
        %435 = vmatpush.msra.mxu0 0.0
        %436 = vmatpush.msra.mxu0 %v372
        %437 = vmatmul.f32.gmra.mxu0 %v374
        %v438 = vpop.f32.mrf.mxu0
        %v439 = vadd.f32 0.0, %v438
        %440 = vmatmul.f32.gmra.mxu0 %v377
        %v441 = vpop.f32.mrf.mxu0
        %442 = vmatmul.f32.gmra.mxu0 %v380
        %v443 = vpop.f32.mrf.mxu0
        %v444 = vadd.f32 0.0, %v443
        %445 = vmatmul.f32.gmra.mxu0 %v383
        %v446 = vpop.f32.mrf.mxu0
        %447 = vmatmul.f32.gmra.mxu0 %v386
        %v448 = vpop.f32.mrf.mxu0
        %v449 = vadd.f32 0.0, %v448
        %450 = vmatmul.f32.gmra.mxu0 %v389
        %v451 = vpop.f32.mrf.mxu0
        %452 = vmatmul.f32.gmra.mxu0 %v392
        %v453 = vpop.f32.mrf.mxu0
        %v454 = vadd.f32 0.0, %v453
        %455 = vmatmul.f32.gmra.mxu0 %v395
        %v456 = vpop.f32.mrf.mxu0
        %457 = vmatmul.f32.gmra.mxu0 %v398
        %v458 = vpop.f32.mrf.mxu0
        %v459 = vadd.f32 0.0, %v458
        %460 = vmatmul.f32.gmra.mxu0 %v401
        %v461 = vpop.f32.mrf.mxu0
        %462 = vmatmul.f32.gmra.mxu0 %v404
        %v463 = vpop.f32.mrf.mxu0
        %v464 = vadd.f32 0.0, %v463
        %465 = vmatmul.f32.gmra.mxu0 %v407
        %v466 = vpop.f32.mrf.mxu0
        %467 = vmatmul.f32.gmra.mxu0 %v410
        %v468 = vpop.f32.mrf.mxu0
        %v469 = vadd.f32 0.0, %v468
        %470 = vmatmul.f32.gmra.mxu0 %v413
        %v471 = vpop.f32.mrf.mxu0
        %472 = vmatmul.f32.gmra.mxu0 %v416
        %v473 = vpop.f32.mrf.mxu0
        %v474 = vadd.f32 0.0, %v473
        %475 = vmatmul.f32.gmra.mxu0 %v419
        %v476 = vpop.f32.mrf.mxu0
        %477 = vdwg.mxu0
        %v479 = vsel %vm283, %v321, 0
        %v482 = vsel %vm283, %v322, 0
        %v485 = vsel %vm283, %v323, 0
        %v488 = vsel %vm283, %v324, 0
        %v491 = vsel %vm283, %v325, 0
        %v494 = vsel %vm283, %v326, 0
        %v497 = vsel %vm283, %v327, 0
        %v500 = vsel %vm283, %v328, 0
        %v503 = vsel %vm283, %v329, 0
        %v506 = vsel %vm283, %v330, 0
        %v509 = vsel %vm283, %v331, 0
        %v512 = vsel %vm283, %v332, 0
        %v515 = vsel %vm283, %v333, 0
        %v518 = vsel %vm283, %v334, 0
        %v521 = vsel %vm283, %v335, 0
        %v524 = vsel %vm283, %v336, 0
        %526 = vmatpush.msra.mxu0 0.0
        %527 = vmatpush.msra.mxu0 0.0
        %528 = vmatpush.msra.mxu0 0.0
        %529 = vmatpush.msra.mxu0 0.0
        %530 = vmatpush.msra.mxu0 0.0
        %531 = vmatpush.msra.mxu0 0.0
        %532 = vmatpush.msra.mxu0 0.0
        %533 = vmatpush.msra.mxu0 0.0
        %534 = vmatpush.msra.mxu0 0.0
        %535 = vmatpush.msra.mxu0 0.0
        %536 = vmatpush.msra.mxu0 0.0
        %537 = vmatpush.msra.mxu0 0.0
        %538 = vmatpush.msra.mxu0 0.0
        %539 = vmatpush.msra.mxu0 0.0
        %540 = vmatpush.msra.mxu0 0.0
        %541 = vmatpush.msra.mxu0 %v370
        %542 = vmatmul.f32.gmra.mxu0 %v479
        %v543 = vpop.f32.mrf.mxu0
        %v544 = vadd.f32 %v439, %v543
        %545 = vmatmul.f32.gmra.mxu0 %v482
        %v546 = vpop.f32.mrf.mxu0
        %547 = vmatmul.f32.gmra.mxu0 %v485
        %v548 = vpop.f32.mrf.mxu0
        %v549 = vadd.f32 %v444, %v548
        %550 = vmatmul.f32.gmra.mxu0 %v488
        %v551 = vpop.f32.mrf.mxu0
        %552 = vmatmul.f32.gmra.mxu0 %v491
        %v553 = vpop.f32.mrf.mxu0
        %v554 = vadd.f32 %v449, %v553
        %555 = vmatmul.f32.gmra.mxu0 %v494
        %v556 = vpop.f32.mrf.mxu0
        %557 = vmatmul.f32.gmra.mxu0 %v497
        %v558 = vpop.f32.mrf.mxu0
        %v559 = vadd.f32 %v454, %v558
        %560 = vmatmul.f32.gmra.mxu0 %v500
        %v561 = vpop.f32.mrf.mxu0
        %562 = vmatmul.f32.gmra.mxu0 %v503
        %v563 = vpop.f32.mrf.mxu0
        %v564 = vadd.f32 %v459, %v563
        %565 = vmatmul.f32.gmra.mxu0 %v506
        %v566 = vpop.f32.mrf.mxu0
        %567 = vmatmul.f32.gmra.mxu0 %v509
        %v568 = vpop.f32.mrf.mxu0
        %v569 = vadd.f32 %v464, %v568
        %570 = vmatmul.f32.gmra.mxu0 %v512
        %v571 = vpop.f32.mrf.mxu0
        %572 = vmatmul.f32.gmra.mxu0 %v515
        %v573 = vpop.f32.mrf.mxu0
        %v574 = vadd.f32 %v469, %v573
        %575 = vmatmul.f32.gmra.mxu0 %v518
        %v576 = vpop.f32.mrf.mxu0
        %577 = vmatmul.f32.gmra.mxu0 %v521
        %v578 = vpop.f32.mrf.mxu0
        %v579 = vadd.f32 %v474, %v578
        %580 = vmatmul.f32.gmra.mxu0 %v524
        %v581 = vpop.f32.mrf.mxu0
        %582 = vdwg.mxu0
        %s583 = scalar_lea.vmem %s2, 48
        %v584 = vld [vmem:[%s583] sm:$0xff]
        %v586 = vsel %vm283, %v354, 0
        %v589 = vsel %vm283, %v355, 0
        %v592 = vsel %vm283, %v356, 0
        %v595 = vsel %vm283, %v357, 0
        %v598 = vsel %vm283, %v358, 0
        %v601 = vsel %vm283, %v359, 0
        %v604 = vsel %vm283, %v360, 0
        %v607 = vsel %vm283, %v361, 0
        %v610 = vsel %vm283, %v362, 0
        %v613 = vsel %vm283, %v363, 0
        %v616 = vsel %vm283, %v364, 0
        %v619 = vsel %vm283, %v365, 0
        %v622 = vsel %vm283, %v366, 0
        %v625 = vsel %vm283, %v367, 0
        %v628 = vsel %vm283, %v368, 0
        %v631 = vsel %vm283, %v369, 0
        %633 = vmatpush.msra.mxu0 0.0
        %634 = vmatpush.msra.mxu0 0.0
        %635 = vmatpush.msra.mxu0 0.0
        %636 = vmatpush.msra.mxu0 0.0
        %637 = vmatpush.msra.mxu0 0.0
        %638 = vmatpush.msra.mxu0 0.0
        %639 = vmatpush.msra.mxu0 0.0
        %640 = vmatpush.msra.mxu0 0.0
        %641 = vmatpush.msra.mxu0 0.0
        %642 = vmatpush.msra.mxu0 0.0
        %643 = vmatpush.msra.mxu0 0.0
        %644 = vmatpush.msra.mxu0 0.0
        %645 = vmatpush.msra.mxu0 0.0
        %646 = vmatpush.msra.mxu0 0.0
        %647 = vmatpush.msra.mxu0 0.0
        %648 = vmatpush.msra.mxu0 %v584
        %649 = vmatmul.f32.gmra.mxu0 %v586
        %v650 = vpop.f32.mrf.mxu0
        %v651 = vadd.f32 0.0, %v650
        %652 = vmatmul.f32.gmra.mxu0 %v589
        %v653 = vpop.f32.mrf.mxu0
        %654 = vmatmul.f32.gmra.mxu0 %v592
        %v655 = vpop.f32.mrf.mxu0
        %v656 = vadd.f32 0.0, %v655
        %657 = vmatmul.f32.gmra.mxu0 %v595
        %v658 = vpop.f32.mrf.mxu0
        %659 = vmatmul.f32.gmra.mxu0 %v598
        %v660 = vpop.f32.mrf.mxu0
        %v661 = vadd.f32 0.0, %v660
        %662 = vmatmul.f32.gmra.mxu0 %v601
        %v663 = vpop.f32.mrf.mxu0
        %664 = vmatmul.f32.gmra.mxu0 %v604
        %v665 = vpop.f32.mrf.mxu0
        %v666 = vadd.f32 0.0, %v665
        %667 = vmatmul.f32.gmra.mxu0 %v607
        %v668 = vpop.f32.mrf.mxu0
        %669 = vmatmul.f32.gmra.mxu0 %v610
        %v670 = vpop.f32.mrf.mxu0
        %v671 = vadd.f32 0.0, %v670
        %672 = vmatmul.f32.gmra.mxu0 %v613
        %v673 = vpop.f32.mrf.mxu0
        %674 = vmatmul.f32.gmra.mxu0 %v616
        %v675 = vpop.f32.mrf.mxu0
        %v676 = vadd.f32 0.0, %v675
        %677 = vmatmul.f32.gmra.mxu0 %v619
        %v678 = vpop.f32.mrf.mxu0
        %679 = vmatmul.f32.gmra.mxu0 %v622
        %v680 = vpop.f32.mrf.mxu0
        %v681 = vadd.f32 0.0, %v680
        %682 = vmatmul.f32.gmra.mxu0 %v625
        %v683 = vpop.f32.mrf.mxu0
        %684 = vmatmul.f32.gmra.mxu0 %v628
        %v685 = vpop.f32.mrf.mxu0
        %v686 = vadd.f32 0.0, %v685
        %687 = vmatmul.f32.gmra.mxu0 %v631
        %v688 = vpop.f32.mrf.mxu0
        %689 = vdwg.mxu0
        %v690 = vadd.f32 %v544, %v651
        %v691 = vadd.f32 %v549, %v656
        %v692 = vadd.f32 %v554, %v661
        %v693 = vadd.f32 %v559, %v666
        %v694 = vadd.f32 %v564, %v671
        %v695 = vadd.f32 %v569, %v676
        %v696 = vadd.f32 %v574, %v681
        %v697 = vadd.f32 %v579, %v686
        %v698 = vadd.f32 %v690, 0.0
        %v699 = vadd.f32 %v691, 0.0
        %v700 = vadd.f32 %v692, 0.0
        %v701 = vadd.f32 %v693, 0.0
        %v702 = vadd.f32 %v694, 0.0
        %v703 = vadd.f32 %v695, 0.0
        %v704 = vadd.f32 %v696, 0.0
        %v705 = vadd.f32 %v697, 0.0
        %s706 = scalar_lea.vmem %s2, 8
        %v707 = vld [vmem:[%s706] sm:$0xff]
        %s708 = scalar_lea.vmem %s2, 32
        %v709 = vld [vmem:[%s708] sm:$0xff]
        %710 = vmatpush.msra.mxu0 0.0
        %711 = vmatpush.msra.mxu0 0.0
        %712 = vmatpush.msra.mxu0 0.0
        %713 = vmatpush.msra.mxu0 0.0
        %714 = vmatpush.msra.mxu0 0.0
        %715 = vmatpush.msra.mxu0 0.0
        %716 = vmatpush.msra.mxu0 0.0
        %717 = vmatpush.msra.mxu0 0.0
        %718 = vmatpush.msra.mxu0 0.0
        %719 = vmatpush.msra.mxu0 0.0
        %720 = vmatpush.msra.mxu0 0.0
        %721 = vmatpush.msra.mxu0 0.0
        %722 = vmatpush.msra.mxu0 0.0
        %723 = vmatpush.msra.mxu0 0.0
        %724 = vmatpush.msra.mxu0 0.0
        %725 = vmatpush.msra.mxu0 %v709
        %726 = vmatmul.f32.gmra.mxu0 %v374
        %v727 = vpop.f32.mrf.mxu0
        %v728 = vadd.f32 0.0, %v727
        %729 = vmatmul.f32.gmra.mxu0 %v377
        %v730 = vpop.f32.mrf.mxu0
        %v731 = vadd.f32 0.0, %v730
        %732 = vmatmul.f32.gmra.mxu0 %v380
        %v733 = vpop.f32.mrf.mxu0
        %v734 = vadd.f32 0.0, %v733
        %735 = vmatmul.f32.gmra.mxu0 %v383
        %v736 = vpop.f32.mrf.mxu0
        %v737 = vadd.f32 0.0, %v736
        %738 = vmatmul.f32.gmra.mxu0 %v386
        %v739 = vpop.f32.mrf.mxu0
        %v740 = vadd.f32 0.0, %v739
        %741 = vmatmul.f32.gmra.mxu0 %v389
        %v742 = vpop.f32.mrf.mxu0
        %v743 = vadd.f32 0.0, %v742
        %744 = vmatmul.f32.gmra.mxu0 %v392
        %v745 = vpop.f32.mrf.mxu0
        %v746 = vadd.f32 0.0, %v745
        %747 = vmatmul.f32.gmra.mxu0 %v395
        %v748 = vpop.f32.mrf.mxu0
        %v749 = vadd.f32 0.0, %v748
        %750 = vmatmul.f32.gmra.mxu0 %v398
        %v751 = vpop.f32.mrf.mxu0
        %v752 = vadd.f32 0.0, %v751
        %753 = vmatmul.f32.gmra.mxu0 %v401
        %v754 = vpop.f32.mrf.mxu0
        %v755 = vadd.f32 0.0, %v754
        %756 = vmatmul.f32.gmra.mxu0 %v404
        %v757 = vpop.f32.mrf.mxu0
        %v758 = vadd.f32 0.0, %v757
        %759 = vmatmul.f32.gmra.mxu0 %v407
        %v760 = vpop.f32.mrf.mxu0
        %v761 = vadd.f32 0.0, %v760
        %762 = vmatmul.f32.gmra.mxu0 %v410
        %v763 = vpop.f32.mrf.mxu0
        %v764 = vadd.f32 0.0, %v763
        %765 = vmatmul.f32.gmra.mxu0 %v413
        %v766 = vpop.f32.mrf.mxu0
        %v767 = vadd.f32 0.0, %v766
        %768 = vmatmul.f32.gmra.mxu0 %v416
        %v769 = vpop.f32.mrf.mxu0
        %v770 = vadd.f32 0.0, %v769
        %771 = vmatmul.f32.gmra.mxu0 %v419
        %v772 = vpop.f32.mrf.mxu0
        %v773 = vadd.f32 0.0, %v772
        %774 = vdwg.mxu0
        %775 = vmatpush.msra.mxu0 0.0
        %776 = vmatpush.msra.mxu0 0.0
        %777 = vmatpush.msra.mxu0 0.0
        %778 = vmatpush.msra.mxu0 0.0
        %779 = vmatpush.msra.mxu0 0.0
        %780 = vmatpush.msra.mxu0 0.0
        %781 = vmatpush.msra.mxu0 0.0
        %782 = vmatpush.msra.mxu0 0.0
        %783 = vmatpush.msra.mxu0 0.0
        %784 = vmatpush.msra.mxu0 0.0
        %785 = vmatpush.msra.mxu0 0.0
        %786 = vmatpush.msra.mxu0 0.0
        %787 = vmatpush.msra.mxu0 0.0
        %788 = vmatpush.msra.mxu0 0.0
        %789 = vmatpush.msra.mxu0 0.0
        %790 = vmatpush.msra.mxu0 %v707
        %791 = vmatmul.f32.gmra.mxu0 %v479
        %v792 = vpop.f32.mrf.mxu0
        %v793 = vadd.f32 %v728, %v792
        %794 = vmatmul.f32.gmra.mxu0 %v482
        %v795 = vpop.f32.mrf.mxu0
        %v796 = vadd.f32 %v731, %v795
        %797 = vmatmul.f32.gmra.mxu0 %v485
        %v798 = vpop.f32.mrf.mxu0
        %v799 = vadd.f32 %v734, %v798
        %800 = vmatmul.f32.gmra.mxu0 %v488
        %v801 = vpop.f32.mrf.mxu0
        %v802 = vadd.f32 %v737, %v801
        %803 = vmatmul.f32.gmra.mxu0 %v491
        %v804 = vpop.f32.mrf.mxu0
        %v805 = vadd.f32 %v740, %v804
        %806 = vmatmul.f32.gmra.mxu0 %v494
        %v807 = vpop.f32.mrf.mxu0
        %v808 = vadd.f32 %v743, %v807
        %809 = vmatmul.f32.gmra.mxu0 %v497
        %v810 = vpop.f32.mrf.mxu0
        %v811 = vadd.f32 %v746, %v810
        %812 = vmatmul.f32.gmra.mxu0 %v500
        %v813 = vpop.f32.mrf.mxu0
        %v814 = vadd.f32 %v749, %v813
        %815 = vmatmul.f32.gmra.mxu0 %v503
        %v816 = vpop.f32.mrf.mxu0
        %v817 = vadd.f32 %v752, %v816
        %818 = vmatmul.f32.gmra.mxu0 %v506
        %v819 = vpop.f32.mrf.mxu0
        %v820 = vadd.f32 %v755, %v819
        %821 = vmatmul.f32.gmra.mxu0 %v509
        %v822 = vpop.f32.mrf.mxu0
        %v823 = vadd.f32 %v758, %v822
        %824 = vmatmul.f32.gmra.mxu0 %v512
        %v825 = vpop.f32.mrf.mxu0
        %v826 = vadd.f32 %v761, %v825
        %827 = vmatmul.f32.gmra.mxu0 %v515
        %v828 = vpop.f32.mrf.mxu0
        %v829 = vadd.f32 %v764, %v828
        %830 = vmatmul.f32.gmra.mxu0 %v518
        %v831 = vpop.f32.mrf.mxu0
        %v832 = vadd.f32 %v767, %v831
        %833 = vmatmul.f32.gmra.mxu0 %v521
        %v834 = vpop.f32.mrf.mxu0
        %v835 = vadd.f32 %v770, %v834
        %836 = vmatmul.f32.gmra.mxu0 %v524
        %v837 = vpop.f32.mrf.mxu0
        %v838 = vadd.f32 %v773, %v837
        %839 = vdwg.mxu0
        %s840 = scalar_lea.vmem %s2, 56
        %v841 = vld [vmem:[%s840] sm:$0xff]
        %842 = vmatpush.msra.mxu0 0.0
        %843 = vmatpush.msra.mxu0 0.0
        %844 = vmatpush.msra.mxu0 0.0
        %845 = vmatpush.msra.mxu0 0.0
        %846 = vmatpush.msra.mxu0 0.0
        %847 = vmatpush.msra.mxu0 0.0
        %848 = vmatpush.msra.mxu0 0.0
        %849 = vmatpush.msra.mxu0 0.0
        %850 = vmatpush.msra.mxu0 0.0
        %851 = vmatpush.msra.mxu0 0.0
        %852 = vmatpush.msra.mxu0 0.0
        %853 = vmatpush.msra.mxu0 0.0
        %854 = vmatpush.msra.mxu0 0.0
        %855 = vmatpush.msra.mxu0 0.0
        %856 = vmatpush.msra.mxu0 0.0
        %857 = vmatpush.msra.mxu0 %v841
        %858 = vmatmul.f32.gmra.mxu0 %v586
        %v859 = vpop.f32.mrf.mxu0
        %v860 = vadd.f32 0.0, %v859
        %861 = vmatmul.f32.gmra.mxu0 %v589
        %v862 = vpop.f32.mrf.mxu0
        %v863 = vadd.f32 0.0, %v862
        %864 = vmatmul.f32.gmra.mxu0 %v592
        %v865 = vpop.f32.mrf.mxu0
        %v866 = vadd.f32 0.0, %v865
        %867 = vmatmul.f32.gmra.mxu0 %v595
        %v868 = vpop.f32.mrf.mxu0
        %v869 = vadd.f32 0.0, %v868
        %870 = vmatmul.f32.gmra.mxu0 %v598
        %v871 = vpop.f32.mrf.mxu0
        %v872 = vadd.f32 0.0, %v871
        %873 = vmatmul.f32.gmra.mxu0 %v601
        %v874 = vpop.f32.mrf.mxu0
        %v875 = vadd.f32 0.0, %v874
        %876 = vmatmul.f32.gmra.mxu0 %v604
        %v877 = vpop.f32.mrf.mxu0
        %v878 = vadd.f32 0.0, %v877
        %879 = vmatmul.f32.gmra.mxu0 %v607
        %v880 = vpop.f32.mrf.mxu0
        %v881 = vadd.f32 0.0, %v880
        %882 = vmatmul.f32.gmra.mxu0 %v610
        %v883 = vpop.f32.mrf.mxu0
        %v884 = vadd.f32 0.0, %v883
        %885 = vmatmul.f32.gmra.mxu0 %v613
        %v886 = vpop.f32.mrf.mxu0
        %v887 = vadd.f32 0.0, %v886
        %888 = vmatmul.f32.gmra.mxu0 %v616
        %v889 = vpop.f32.mrf.mxu0
        %v890 = vadd.f32 0.0, %v889
        %891 = vmatmul.f32.gmra.mxu0 %v619
        %v892 = vpop.f32.mrf.mxu0
        %v893 = vadd.f32 0.0, %v892
        %894 = vmatmul.f32.gmra.mxu0 %v622
        %v895 = vpop.f32.mrf.mxu0
        %v896 = vadd.f32 0.0, %v895
        %897 = vmatmul.f32.gmra.mxu0 %v625
        %v898 = vpop.f32.mrf.mxu0
        %v899 = vadd.f32 0.0, %v898
        %900 = vmatmul.f32.gmra.mxu0 %v628
        %v901 = vpop.f32.mrf.mxu0
        %v902 = vadd.f32 0.0, %v901
        %903 = vmatmul.f32.gmra.mxu0 %v631
        %v904 = vpop.f32.mrf.mxu0
        %v905 = vadd.f32 0.0, %v904
        %906 = vdwg.mxu0
        %v907 = vadd.f32 %v793, %v860
        %v908 = vadd.f32 %v796, %v863
        %v909 = vadd.f32 %v799, %v866
        %v910 = vadd.f32 %v802, %v869
        %v911 = vadd.f32 %v805, %v872
        %v912 = vadd.f32 %v808, %v875
        %v913 = vadd.f32 %v811, %v878
        %v914 = vadd.f32 %v814, %v881
        %v915 = vadd.f32 %v817, %v884
        %v916 = vadd.f32 %v820, %v887
        %v917 = vadd.f32 %v823, %v890
        %v918 = vadd.f32 %v826, %v893
        %v919 = vadd.f32 %v829, %v896
        %v920 = vadd.f32 %v832, %v899
        %v921 = vadd.f32 %v835, %v902
        %v922 = vadd.f32 %v838, %v905
        %vm939 = vcmask 1046528
        %v940 = vrot.slane %v907, 1
        %v941 = vrot.slane %v908, 1
        %v942 = vsel %vm939, %v940, %v941
        %v943 = vrot.slane %v909, 1
        %v944 = vrot.slane %v910, 1
        %v945 = vsel %vm939, %v943, %v944
        %v946 = vrot.slane %v911, 1
        %v947 = vrot.slane %v912, 1
        %v948 = vsel %vm939, %v946, %v947
        %v949 = vrot.slane %v913, 1
        %v950 = vrot.slane %v914, 1
        %v951 = vsel %vm939, %v949, %v950
        %v952 = vrot.slane %v915, 1
        %v953 = vrot.slane %v916, 1
        %v954 = vsel %vm939, %v952, %v953
        %v955 = vrot.slane %v917, 1
        %v956 = vrot.slane %v918, 1
        %v957 = vsel %vm939, %v955, %v956
        %v958 = vrot.slane %v919, 1
        %v959 = vrot.slane %v920, 1
        %v960 = vsel %vm939, %v958, %v959
        %v961 = vrot.slane %v921, 1
        %v962 = vrot.slane %v922, 1
        %v963 = vsel %vm939, %v961, %v962
        %v972 = vadd.f32 %v698, %v942
        %v973 = vadd.f32 %v699, %v945
        %v974 = vadd.f32 %v700, %v948
        %v975 = vadd.f32 %v701, %v951
        %v976 = vadd.f32 %v702, %v954
        %v977 = vadd.f32 %v703, %v957
        %v978 = vadd.f32 %v704, %v960
        %v979 = vadd.f32 %v705, %v963
        %s980 = scalar_lea.vmem %s2, 16
        %v981 = vld [vmem:[%s980] sm:$0xff]
        %s982 = scalar_lea.vmem %s2, 40
        %v983 = vld [vmem:[%s982] sm:$0xff]
        %984 = vmatpush.msra.mxu0 0.0
        %985 = vmatpush.msra.mxu0 0.0
        %986 = vmatpush.msra.mxu0 0.0
        %987 = vmatpush.msra.mxu0 0.0
        %988 = vmatpush.msra.mxu0 0.0
        %989 = vmatpush.msra.mxu0 0.0
        %990 = vmatpush.msra.mxu0 0.0
        %991 = vmatpush.msra.mxu0 0.0
        %992 = vmatpush.msra.mxu0 0.0
        %993 = vmatpush.msra.mxu0 0.0
        %994 = vmatpush.msra.mxu0 0.0
        %995 = vmatpush.msra.mxu0 0.0
        %996 = vmatpush.msra.mxu0 0.0
        %997 = vmatpush.msra.mxu0 0.0
        %998 = vmatpush.msra.mxu0 0.0
        %999 = vmatpush.msra.mxu0 %v983
        %1000 = vmatmul.f32.gmra.mxu0 %v374
        %v1001 = vpop.f32.mrf.mxu0
        %v1002 = vadd.f32 0.0, %v1001
        %1003 = vmatmul.f32.gmra.mxu0 %v377
        %v1004 = vpop.f32.mrf.mxu0
        %v1005 = vadd.f32 0.0, %v1004
        %1006 = vmatmul.f32.gmra.mxu0 %v380
        %v1007 = vpop.f32.mrf.mxu0
        %v1008 = vadd.f32 0.0, %v1007
        %1009 = vmatmul.f32.gmra.mxu0 %v383
        %v1010 = vpop.f32.mrf.mxu0
        %v1011 = vadd.f32 0.0, %v1010
        %1012 = vmatmul.f32.gmra.mxu0 %v386
        %v1013 = vpop.f32.mrf.mxu0
        %v1014 = vadd.f32 0.0, %v1013
        %1015 = vmatmul.f32.gmra.mxu0 %v389
        %v1016 = vpop.f32.mrf.mxu0
        %v1017 = vadd.f32 0.0, %v1016
        %1018 = vmatmul.f32.gmra.mxu0 %v392
        %v1019 = vpop.f32.mrf.mxu0
        %v1020 = vadd.f32 0.0, %v1019
        %1021 = vmatmul.f32.gmra.mxu0 %v395
        %v1022 = vpop.f32.mrf.mxu0
        %v1023 = vadd.f32 0.0, %v1022
        %1024 = vmatmul.f32.gmra.mxu0 %v398
        %v1025 = vpop.f32.mrf.mxu0
        %v1026 = vadd.f32 0.0, %v1025
        %1027 = vmatmul.f32.gmra.mxu0 %v401
        %v1028 = vpop.f32.mrf.mxu0
        %v1029 = vadd.f32 0.0, %v1028
        %1030 = vmatmul.f32.gmra.mxu0 %v404
        %v1031 = vpop.f32.mrf.mxu0
        %v1032 = vadd.f32 0.0, %v1031
        %1033 = vmatmul.f32.gmra.mxu0 %v407
        %v1034 = vpop.f32.mrf.mxu0
        %v1035 = vadd.f32 0.0, %v1034
        %1036 = vmatmul.f32.gmra.mxu0 %v410
        %v1037 = vpop.f32.mrf.mxu0
        %v1038 = vadd.f32 0.0, %v1037
        %1039 = vmatmul.f32.gmra.mxu0 %v413
        %v1040 = vpop.f32.mrf.mxu0
        %v1041 = vadd.f32 0.0, %v1040
        %1042 = vmatmul.f32.gmra.mxu0 %v416
        %v1043 = vpop.f32.mrf.mxu0
        %v1044 = vadd.f32 0.0, %v1043
        %1045 = vmatmul.f32.gmra.mxu0 %v419
        %v1046 = vpop.f32.mrf.mxu0
        %v1047 = vadd.f32 0.0, %v1046
        %1048 = vdwg.mxu0
        %1049 = vmatpush.msra.mxu0 0.0
        %1050 = vmatpush.msra.mxu0 0.0
        %1051 = vmatpush.msra.mxu0 0.0
        %1052 = vmatpush.msra.mxu0 0.0
        %1053 = vmatpush.msra.mxu0 0.0
        %1054 = vmatpush.msra.mxu0 0.0
        %1055 = vmatpush.msra.mxu0 0.0
        %1056 = vmatpush.msra.mxu0 0.0
        %1057 = vmatpush.msra.mxu0 0.0
        %1058 = vmatpush.msra.mxu0 0.0
        %1059 = vmatpush.msra.mxu0 0.0
        %1060 = vmatpush.msra.mxu0 0.0
        %1061 = vmatpush.msra.mxu0 0.0
        %1062 = vmatpush.msra.mxu0 0.0
        %1063 = vmatpush.msra.mxu0 0.0
        %1064 = vmatpush.msra.mxu0 %v981
        %1065 = vmatmul.f32.gmra.mxu0 %v479
        %v1066 = vpop.f32.mrf.mxu0
        %v1067 = vadd.f32 %v1002, %v1066
        %1068 = vmatmul.f32.gmra.mxu0 %v482
        %v1069 = vpop.f32.mrf.mxu0
        %v1070 = vadd.f32 %v1005, %v1069
        %1071 = vmatmul.f32.gmra.mxu0 %v485
        %v1072 = vpop.f32.mrf.mxu0
        %v1073 = vadd.f32 %v1008, %v1072
        %1074 = vmatmul.f32.gmra.mxu0 %v488
        %v1075 = vpop.f32.mrf.mxu0
        %v1076 = vadd.f32 %v1011, %v1075
        %1077 = vmatmul.f32.gmra.mxu0 %v491
        %v1078 = vpop.f32.mrf.mxu0
        %v1079 = vadd.f32 %v1014, %v1078
        %1080 = vmatmul.f32.gmra.mxu0 %v494
        %v1081 = vpop.f32.mrf.mxu0
        %v1082 = vadd.f32 %v1017, %v1081
        %1083 = vmatmul.f32.gmra.mxu0 %v497
        %v1084 = vpop.f32.mrf.mxu0
        %v1085 = vadd.f32 %v1020, %v1084
        %1086 = vmatmul.f32.gmra.mxu0 %v500
        %v1087 = vpop.f32.mrf.mxu0
        %v1088 = vadd.f32 %v1023, %v1087
        %1089 = vmatmul.f32.gmra.mxu0 %v503
        %v1090 = vpop.f32.mrf.mxu0
        %v1091 = vadd.f32 %v1026, %v1090
        %1092 = vmatmul.f32.gmra.mxu0 %v506
        %v1093 = vpop.f32.mrf.mxu0
        %v1094 = vadd.f32 %v1029, %v1093
        %1095 = vmatmul.f32.gmra.mxu0 %v509
        %v1096 = vpop.f32.mrf.mxu0
        %v1097 = vadd.f32 %v1032, %v1096
        %1098 = vmatmul.f32.gmra.mxu0 %v512
        %v1099 = vpop.f32.mrf.mxu0
        %v1100 = vadd.f32 %v1035, %v1099
        %1101 = vmatmul.f32.gmra.mxu0 %v515
        %v1102 = vpop.f32.mrf.mxu0
        %v1103 = vadd.f32 %v1038, %v1102
        %1104 = vmatmul.f32.gmra.mxu0 %v518
        %v1105 = vpop.f32.mrf.mxu0
        %v1106 = vadd.f32 %v1041, %v1105
        %1107 = vmatmul.f32.gmra.mxu0 %v521
        %v1108 = vpop.f32.mrf.mxu0
        %v1109 = vadd.f32 %v1044, %v1108
        %1110 = vmatmul.f32.gmra.mxu0 %v524
        %v1111 = vpop.f32.mrf.mxu0
        %v1112 = vadd.f32 %v1047, %v1111
        %1113 = vdwg.mxu0
        %s1114 = scalar_lea.vmem %s2, 64
        %v1115 = vld [vmem:[%s1114] sm:$0xff]
        %1116 = vmatpush.msra.mxu0 0.0
        %1117 = vmatpush.msra.mxu0 0.0
        %1118 = vmatpush.msra.mxu0 0.0
        %1119 = vmatpush.msra.mxu0 0.0
        %1120 = vmatpush.msra.mxu0 0.0
        %1121 = vmatpush.msra.mxu0 0.0
        %1122 = vmatpush.msra.mxu0 0.0
        %1123 = vmatpush.msra.mxu0 0.0
        %1124 = vmatpush.msra.mxu0 0.0
        %1125 = vmatpush.msra.mxu0 0.0
        %1126 = vmatpush.msra.mxu0 0.0
        %1127 = vmatpush.msra.mxu0 0.0
        %1128 = vmatpush.msra.mxu0 0.0
        %1129 = vmatpush.msra.mxu0 0.0
        %1130 = vmatpush.msra.mxu0 0.0
        %1131 = vmatpush.msra.mxu0 %v1115
        %1132 = vmatmul.f32.gmra.mxu0 %v586
        %v1133 = vpop.f32.mrf.mxu0
        %v1134 = vadd.f32 0.0, %v1133
        %1135 = vmatmul.f32.gmra.mxu0 %v589
        %v1136 = vpop.f32.mrf.mxu0
        %v1137 = vadd.f32 0.0, %v1136
        %1138 = vmatmul.f32.gmra.mxu0 %v592
        %v1139 = vpop.f32.mrf.mxu0
        %v1140 = vadd.f32 0.0, %v1139
        %1141 = vmatmul.f32.gmra.mxu0 %v595
        %v1142 = vpop.f32.mrf.mxu0
        %v1143 = vadd.f32 0.0, %v1142
        %1144 = vmatmul.f32.gmra.mxu0 %v598
        %v1145 = vpop.f32.mrf.mxu0
        %v1146 = vadd.f32 0.0, %v1145
        %1147 = vmatmul.f32.gmra.mxu0 %v601
        %v1148 = vpop.f32.mrf.mxu0
        %v1149 = vadd.f32 0.0, %v1148
        %1150 = vmatmul.f32.gmra.mxu0 %v604
        %v1151 = vpop.f32.mrf.mxu0
        %v1152 = vadd.f32 0.0, %v1151
        %1153 = vmatmul.f32.gmra.mxu0 %v607
        %v1154 = vpop.f32.mrf.mxu0
        %v1155 = vadd.f32 0.0, %v1154
        %1156 = vmatmul.f32.gmra.mxu0 %v610
        %v1157 = vpop.f32.mrf.mxu0
        %v1158 = vadd.f32 0.0, %v1157
        %1159 = vmatmul.f32.gmra.mxu0 %v613
        %v1160 = vpop.f32.mrf.mxu0
        %v1161 = vadd.f32 0.0, %v1160
        %1162 = vmatmul.f32.gmra.mxu0 %v616
        %v1163 = vpop.f32.mrf.mxu0
        %v1164 = vadd.f32 0.0, %v1163
        %1165 = vmatmul.f32.gmra.mxu0 %v619
        %v1166 = vpop.f32.mrf.mxu0
        %v1167 = vadd.f32 0.0, %v1166
        %1168 = vmatmul.f32.gmra.mxu0 %v622
        %v1169 = vpop.f32.mrf.mxu0
        %v1170 = vadd.f32 0.0, %v1169
        %1171 = vmatmul.f32.gmra.mxu0 %v625
        %v1172 = vpop.f32.mrf.mxu0
        %v1173 = vadd.f32 0.0, %v1172
        %1174 = vmatmul.f32.gmra.mxu0 %v628
        %v1175 = vpop.f32.mrf.mxu0
        %v1176 = vadd.f32 0.0, %v1175
        %1177 = vmatmul.f32.gmra.mxu0 %v631
        %v1178 = vpop.f32.mrf.mxu0
        %v1179 = vadd.f32 0.0, %v1178
        %1180 = vdwg.mxu0
        %v1181 = vadd.f32 %v1067, %v1134
        %v1182 = vadd.f32 %v1070, %v1137
        %v1183 = vadd.f32 %v1073, %v1140
        %v1184 = vadd.f32 %v1076, %v1143
        %v1185 = vadd.f32 %v1079, %v1146
        %v1186 = vadd.f32 %v1082, %v1149
        %v1187 = vadd.f32 %v1085, %v1152
        %v1188 = vadd.f32 %v1088, %v1155
        %v1189 = vadd.f32 %v1091, %v1158
        %v1190 = vadd.f32 %v1094, %v1161
        %v1191 = vadd.f32 %v1097, %v1164
        %v1192 = vadd.f32 %v1100, %v1167
        %v1193 = vadd.f32 %v1103, %v1170
        %v1194 = vadd.f32 %v1106, %v1173
        %v1195 = vadd.f32 %v1109, %v1176
        %v1196 = vadd.f32 %v1112, %v1179
        %vm1213 = vcmask 1045504
        %v1214 = vrot.slane %v1181, 2
        %v1215 = vrot.slane %v1182, 2
        %v1216 = vsel %vm1213, %v1214, %v1215
        %v1217 = vrot.slane %v1183, 2
        %v1218 = vrot.slane %v1184, 2
        %v1219 = vsel %vm1213, %v1217, %v1218
        %v1220 = vrot.slane %v1185, 2
        %v1221 = vrot.slane %v1186, 2
        %v1222 = vsel %vm1213, %v1220, %v1221
        %v1223 = vrot.slane %v1187, 2
        %v1224 = vrot.slane %v1188, 2
        %v1225 = vsel %vm1213, %v1223, %v1224
        %v1226 = vrot.slane %v1189, 2
        %v1227 = vrot.slane %v1190, 2
        %v1228 = vsel %vm1213, %v1226, %v1227
        %v1229 = vrot.slane %v1191, 2
        %v1230 = vrot.slane %v1192, 2
        %v1231 = vsel %vm1213, %v1229, %v1230
        %v1232 = vrot.slane %v1193, 2
        %v1233 = vrot.slane %v1194, 2
        %v1234 = vsel %vm1213, %v1232, %v1233
        %v1235 = vrot.slane %v1195, 2
        %v1236 = vrot.slane %v1196, 2
        %v1237 = vsel %vm1213, %v1235, %v1236
        %v1246 = vadd.f32 %v972, %v1216
        %v1247 = vadd.f32 %v973, %v1219
        %v1248 = vadd.f32 %v974, %v1222
        %v1249 = vadd.f32 %v975, %v1225
        %v1250 = vadd.f32 %v976, %v1228
        %v1251 = vadd.f32 %v977, %v1231
        %v1252 = vadd.f32 %v978, %v1234
        %v1253 = vadd.f32 %v979, %v1237
        %1254 = vst.msk [vmem:[%s201] sm:$0xff] %vm283, %v1246
        %1255 = vst.msk [vmem:[%s201 + $0x8] sm:$0xff] %vm283, %v1247
        %1256 = vst.msk [vmem:[%s201 + $0x10] sm:$0xff] %vm283, %v1248
        %1257 = vst.msk [vmem:[%s201 + $0x18] sm:$0xff] %vm283, %v1249
        %1258 = vst.msk [vmem:[%s201 + $0x20] sm:$0xff] %vm283, %v1250
        %1259 = vst.msk [vmem:[%s201 + $0x28] sm:$0xff] %vm283, %v1251
        %1260 = vst.msk [vmem:[%s201 + $0x30] sm:$0xff] %vm283, %v1252
        %1261 = vst.msk [vmem:[%s201 + $0x38] sm:$0xff] %vm283, %v1253
        %s1262 = sand.u32 %s98, 1
        %s1263 = scalar_lea.sflag [#allocation4], %s1262
        %s1264 = sand.u32 %s98, 1
        %s1265 = smul.addr %s1264, 64
        %s1266 = scalar_lea.vmem [#allocation3], %s1265
        %s1267 = sand.u32 %s124, 1
        %s1268 = scalar_lea.sflag [#allocation6], %s1267
        %s1269 = sand.u32 %s124, 1
        %s1270 = smul.addr %s1269, 64
        %s1271 = scalar_lea.vmem [#allocation5], %s1270
        // Predicated region
        $region33: #{tpu_custom_call.1} parent=31 // pred_check
          %p1272 = pneg %p108
        $region34: #{tpu_custom_call.1} parent=31 // pred_check_branch
          %1274 = sbr.rel (%p1272) target = $region36
        $region35: #{tpu_custom_call.1} parent=31 // pred_region
          %1276 = vsyncadd %s1263, 0
          %s1277 = smul.addr %s22, 8
          %s1278 = smul.addr %s1277, 8
          %s1279 = scalar_lea.hbm %s3, %s1278
          %s1280 = sshll.u32 %s1266, 4
          %s1281 = int_to_ptr.vmem [resolvable:$true] %s1280
          %s1282 = sshll.u32 %s1279, 4
          %s1283 = int_to_ptr.hbm [resolvable:$true] %s1282
          %1288 = dma.vmem_to_hbm [thread:$0]  %s1281, 1024, %s1283, %s1263, 128, 128, 8
        $region36: #{tpu_custom_call.1} parent=31 // pred_fallthru
          _
        // Predicated region
        $region37: #{tpu_custom_call.1} parent=31 // pred_check
          %p1289 = pneg %p134
        $region38: #{tpu_custom_call.1} parent=31 // pred_check_branch
          %1291 = sbr.rel (%p1289) target = $region40
        $region39: #{tpu_custom_call.1} parent=31 // pred_region
          %1293 = vsyncadd %s1268, 0
          %s1294 = smul.addr %s22, 8
          %s1295 = smul.addr %s1294, 8
          %s1296 = scalar_lea.hbm %s4, %s1295
          %s1297 = sshll.u32 %s1271, 4
          %s1298 = int_to_ptr.vmem [resolvable:$true] %s1297
          %s1299 = sshll.u32 %s1296, 4
          %s1300 = int_to_ptr.hbm [resolvable:$true] %s1299
          %1305 = dma.vmem_to_hbm [thread:$0]  %s1298, 1024, %s1300, %s1268, 128, 128, 8
        $region40: #{tpu_custom_call.1} parent=31 // pred_fallthru
          _
      $region32: #{tpu_custom_call.1} parent=5 // pred_fallthru
        _
      %p1306 = scmp.le.s32.totalorder 2, %s17
      // Predicated region
      $region41: #{tpu_custom_call.1} parent=5 // pred_check
        %p1307 = pneg %p1306
      $region42: #{tpu_custom_call.1} parent=5 // pred_check_branch
        %1309 = sbr.rel (%p1307) target = $region44
      $region43: #{tpu_custom_call.1} parent=5 // pred_region
        %s1310 = ssub.s32 %s17, 2
        // Predicated region
        $region45: #{tpu_custom_call.1} parent=43 // pred_check
          %p1311 = pneg %p114
        $region46: #{tpu_custom_call.1} parent=43 // pred_check_branch
          %1313 = sbr.rel (%p1311) target = $region48
        $region47: #{tpu_custom_call.1} parent=43 // pred_region
          %s1314 = sand.u32 %s99, 1
          %s1315 = scalar_lea.sflag [#allocation4], %s1314
          %s1316 = sand.u32 %s99, 1
          %s1317 = smul.addr %s1316, 64
          %s1318 = scalar_lea.vmem [#allocation3], %s1317
          %1320 = dma.done %s1315, 1024
        $region48: #{tpu_custom_call.1} parent=43 // pred_fallthru
          _
        // Predicated region
        $region49: #{tpu_custom_call.1} parent=43 // pred_check
          %p1321 = pneg %p140
        $region50: #{tpu_custom_call.1} parent=43 // pred_check_branch
          %1323 = sbr.rel (%p1321) target = $region52
        $region51: #{tpu_custom_call.1} parent=43 // pred_region
          %s1324 = sand.u32 %s125, 1
          %s1325 = scalar_lea.sflag [#allocation6], %s1324
          %s1326 = sand.u32 %s125, 1
          %s1327 = smul.addr %s1326, 64
          %s1328 = scalar_lea.vmem [#allocation5], %s1327
          %1330 = dma.done %s1325, 1024
        $region52: #{tpu_custom_call.1} parent=43 // pred_fallthru
          _
      $region44: #{tpu_custom_call.1} parent=5 // pred_fallthru
        _
    $region6: #{tpu_custom_call.1} parent=1 // loop_footer
      %s21 = sadd.s32 1, %s17
    $region7: #{tpu_custom_call.1} parent=1 // loop_footer_branch
      %16 = sbr.rel target = $region3
    $region8: #{tpu_custom_call.1} parent=1 // loop_exit
      _
    %1331 = vsyncpa [#allocation4], 1
    %s1332 = scalar_lea.sflag [#allocation4], 1
    %1333 = vsyncpa %s1332, 1
    %1334 = vsyncpa [#allocation6], 1
    %s1335 = scalar_lea.sflag [#allocation6], 1
    %1336 = vsyncpa %s1335, 1

</llo_original>
